<compile_context>
chip_gen: v6e
topology: v6e:2x2x1
jax: 0.10.0
libtpu: 0.0.40
codegen_flags: <defaults>
</compile_context>

<pallas_src>
import math

import jax
import jax.numpy as jnp
from jax import lax
from jax.experimental import pallas as pl
from jax.experimental.pallas import tpu as pltpu


# ----------------------------------------------------------------------------- #
# Pallas kernel: full multi-head attention for one batch element.
# ----------------------------------------------------------------------------- #
def _make_mha_kernel(seq: int, d_model: int, n_heads: int):
    S, DM, H = seq, d_model, n_heads
    DK = DM // H
    scale = 1.0 / math.sqrt(DK)
    NEG = -1e9  # masked_fill value used by the PyTorch module

    def kernel(q_ref, k_ref, v_ref, m_ref,
               wq_ref, bq_ref, wk_ref, bk_ref, wv_ref, bv_ref,
               wo_ref, bo_ref, out_ref, attn_ref):
        q = q_ref[0]          # (S, DM)
        k = k_ref[0]          # (S, DM)
        v = v_ref[0]          # (S, DM)
        m = m_ref[0]          # (S, S)

        # Fused input projections: one (S, DM) x (DM, DM) MXU matmul each.
        Q = jnp.dot(q, wq_ref[...], preferred_element_type=jnp.float32) + bq_ref[...]
        K = jnp.dot(k, wk_ref[...], preferred_element_type=jnp.float32) + bk_ref[...]
        V = jnp.dot(v, wv_ref[...], preferred_element_type=jnp.float32) + bv_ref[...]

        # Apply the 1/sqrt(d_k) score scale once to the Q slab (equivalent to
        # scaling every per-head score tile, fewer VPU ops in the unrolled loop).
        Q = Q * scale

        # Mask predicate computed once (shared by all heads).
        mzero = (m == 0.0)

        out_acc = jnp.zeros((S, DM), jnp.float32)
        attn_acc = jnp.zeros((S, S), jnp.float32)

        # Static unroll over heads (H is a tiny compile-time constant).  The
        # concat-over-heads + output Linear is folded into a sum of per-head
        # (S,DK)x(DK,DM) contributions, so no reshape / transpose / concatenate
        # is ever materialized inside the kernel.
        for a in range(H):
            lo = a * DK
            Qa = Q[:, lo:lo + DK]           # (S, DK) static lane slice
            Ka = K[:, lo:lo + DK]
            Va = V[:, lo:lo + DK]

            # scores = (Qa / sqrt(d_k)) @ Ka^T   (transpose folded into dot_general)
            s = lax.dot_general(Qa, Ka, (((1,), (1,)), ((), ())),
                                preferred_element_type=jnp.float32)
            s = jnp.where(mzero, NEG, s)

            # numerically stable softmax over the key axis
            s_max = jnp.max(s, axis=-1, keepdims=True)
            e = jnp.exp(s - s_max)
            p = e / jnp.sum(e, axis=-1, keepdims=True)
            # TODO(synk): training-mode dropout(p=0.1) on p not implemented (eval == identity).

            attn_acc = attn_acc + p
            ctx = jnp.dot(p, Va, preferred_element_type=jnp.float32)          # (S, DK)
            out_acc = out_acc + jnp.dot(ctx, wo_ref[a],
                                        preferred_element_type=jnp.float32)   # (S, DM)

        out_ref[0] = out_acc + bo_ref[...]          # final Linear bias added once
        attn_ref[0] = attn_acc * (1.0 / H)          # torch.mean(attn, dim=1)

    return kernel


# ----------------------------------------------------------------------------- #
# Wrapper: one fused pallas_call over the whole batch.
# ----------------------------------------------------------------------------- #
def multi_headed_attention(query, key, value, mask, params, *, n_heads):
    B, S, DM = query.shape
    DK = DM // n_heads
    wq, bq, wk, bk, wv, bv, wo, bo = params

    # Pre-split the output-projection weight into per-head blocks in the wrapper
    # (layout plumbing outside the kernel): wo rows [a*DK:(a+1)*DK] belong to head a.
    wo_h = wo.reshape(n_heads, DK, DM)

    kernel = _make_mha_kernel(S, DM, n_heads)
    per_b = lambda b: (b, 0, 0)
    full2 = lambda b: (0, 0)
    full3 = lambda b: (0, 0, 0)

    out, attn = pl.pallas_call(
        kernel,
        out_shape=(jax.ShapeDtypeStruct((B, S, DM), jnp.float32),
                   jax.ShapeDtypeStruct((B, S, S), jnp.float32)),
        grid=(B,),
        in_specs=[
            pl.BlockSpec((1, S, DM), per_b),                # query
            pl.BlockSpec((1, S, DM), per_b),                # key
            pl.BlockSpec((1, S, DM), per_b),                # value
            pl.BlockSpec((1, S, S), per_b),                 # mask
            pl.BlockSpec((DM, DM), full2),                  # W_q
            pl.BlockSpec((1, DM), full2),                   # b_q
            pl.BlockSpec((DM, DM), full2),                  # W_k
            pl.BlockSpec((1, DM), full2),                   # b_k
            pl.BlockSpec((DM, DM), full2),                  # W_v
            pl.BlockSpec((1, DM), full2),                   # b_v
            pl.BlockSpec((n_heads, DK, DM), full3),         # W_out (head-split)
            pl.BlockSpec((1, DM), full2),                   # b_out
        ],
        out_specs=(pl.BlockSpec((1, S, DM), per_b),
                   pl.BlockSpec((1, S, S), per_b)),
        compiler_params=pltpu.CompilerParams(
            dimension_semantics=("parallel",)),
    )(query, key, value, mask, wq, bq, wk, bk, wv, bv, wo_h, bo)
    return out, attn


# ----------------------------------------------------------------------------- #
# Pure-JAX reference (mirrors the PyTorch forward, eval mode).
# ----------------------------------------------------------------------------- #
def reference_forward(query, key, value, mask, params, *, n_heads):
    wq, bq, wk, bk, wv, bv, wo, bo = params
    B, S, DM = query.shape
    DK = DM // n_heads

    def proj(x, w, b):
        y = x.reshape(B * S, DM) @ w + b
        return y.reshape(B, S, n_heads, DK).transpose(0, 2, 1, 3)   # (B, H, S, DK)

    Q, K, V = proj(query, wq, bq), proj(key, wk, bk), proj(value, wv, bv)
    scores = jnp.einsum('bhqd,bhkd->bhqk', Q, K) / math.sqrt(DK)
    scores = jnp.where(mask[:, None, :, :] == 0.0, -1e9, scores)
    p = jax.nn.softmax(scores, axis=-1)                              # dropout = identity (eval)
    ctx = jnp.einsum('bhqk,bhkd->bhqd', p, V)
    ctx = ctx.transpose(0, 2, 1, 3).reshape(B * S, DM)
    out = (ctx @ wo + bo).reshape(B, S, DM)
    return out, p.mean(axis=1)


# ----------------------------------------------------------------------------- #
def _init_params(key, d_model):
    DM = d_model
    bound = 1.0 / math.sqrt(DM)
    ks = jax.random.split(key, 8)
    u = lambda k, shape: jax.random.uniform(k, shape, jnp.float32, -bound, bound)
    wq, bq = u(ks[0], (DM, DM)), u(ks[1], (1, DM))
    wk, bk = u(ks[2], (DM, DM)), u(ks[3], (1, DM))
    wv, bv = u(ks[4], (DM, DM)), u(ks[5], (1, DM))
    wo, bo = u(ks[6], (DM, DM)), u(ks[7], (1, DM))
    return (wq, bq, wk, bk, wv, bv, wo, bo)


if __name__ == "__main__":
    B, S, DM, H = 2, 8, 32, 4

    key0 = jax.random.PRNGKey(0)
    kq, kk, kv, km, kp = jax.random.split(key0, 5)

    query = jax.random.normal(kq, (B, S, DM), jnp.float32)
    key_in = jax.random.normal(kk, (B, S, DM), jnp.float32)
    value = jax.random.normal(kv, (B, S, DM), jnp.float32)
    mask = (jax.random.uniform(km, (B, S, S)) > 0.3).astype(jnp.float32)
    params = _init_params(kp, DM)

    out, attn = multi_headed_attention(query, key_in, value, mask, params, n_heads=H)
    out = jax.block_until_ready(out)
    attn = jax.block_until_ready(attn)

    ref_out, ref_attn = reference_forward(query, key_in, value, mask, params, n_heads=H)
    ref_out = jax.block_until_ready(ref_out)
    ref_attn = jax.block_until_ready(ref_attn)

    assert out.shape == (B, S, DM) and attn.shape == (B, S, S)
    assert bool(jnp.all(jnp.isfinite(out))) and bool(jnp.all(jnp.isfinite(attn)))
    assert bool(jnp.allclose(out, ref_out, atol=1e-4, rtol=1e-4)), "output mismatch vs reference"
    assert bool(jnp.allclose(attn, ref_attn, atol=1e-4, rtol=1e-4)), "attn mismatch vs reference"

    print("KERNEL_OK")
</pallas_src>

<mosaic_0001>
module attributes {stable_mosaic.version = 11 : i64} {
  func.func @kernel(%arg0: i32, %arg1: memref<1x8x32xf32, #tpu.memory_space<vmem>>, %arg2: memref<1x8x32xf32, #tpu.memory_space<vmem>>, %arg3: memref<1x8x32xf32, #tpu.memory_space<vmem>>, %arg4: memref<1x8x8xf32, #tpu.memory_space<vmem>>, %arg5: memref<32x32xf32, #tpu.memory_space<vmem>>, %arg6: memref<1x32xf32, #tpu.memory_space<vmem>>, %arg7: memref<32x32xf32, #tpu.memory_space<vmem>>, %arg8: memref<1x32xf32, #tpu.memory_space<vmem>>, %arg9: memref<32x32xf32, #tpu.memory_space<vmem>>, %arg10: memref<1x32xf32, #tpu.memory_space<vmem>>, %arg11: memref<4x8x32xf32, #tpu.memory_space<vmem>>, %arg12: memref<1x32xf32, #tpu.memory_space<vmem>>, %arg13: memref<1x8x32xf32, #tpu.memory_space<vmem>>, %arg14: memref<1x8x8xf32, #tpu.memory_space<vmem>>) attributes {dimension_semantics = [#tpu.dimension_semantics<parallel>], iteration_bounds = array<i64: 2>, scalar_prefetch = 0 : i64, scratch_operands = 0 : i64, tpu.core_type = #tpu.core_type<tc>, window_params = [{transform_indices = @transform_0, window_bounds = array<i64: 1, 8, 32>}, {transform_indices = @transform_1, window_bounds = array<i64: 1, 8, 32>}, {transform_indices = @transform_2, window_bounds = array<i64: 1, 8, 32>}, {transform_indices = @transform_3, window_bounds = array<i64: 1, 8, 8>}, {pipeline_mode = #tpu.pipeline_mode<synchronous>, transform_indices = @transform_4, window_bounds = array<i64: 32, 32>}, {pipeline_mode = #tpu.pipeline_mode<synchronous>, transform_indices = @transform_5, window_bounds = array<i64: 1, 32>}, {pipeline_mode = #tpu.pipeline_mode<synchronous>, transform_indices = @transform_6, window_bounds = array<i64: 32, 32>}, {pipeline_mode = #tpu.pipeline_mode<synchronous>, transform_indices = @transform_7, window_bounds = array<i64: 1, 32>}, {pipeline_mode = #tpu.pipeline_mode<synchronous>, transform_indices = @transform_8, window_bounds = array<i64: 32, 32>}, {pipeline_mode = #tpu.pipeline_mode<synchronous>, transform_indices = @transform_9, window_bounds = array<i64: 1, 32>}, {pipeline_mode = #tpu.pipeline_mode<synchronous>, transform_indices = @transform_10, window_bounds = array<i64: 4, 8, 32>}, {pipeline_mode = #tpu.pipeline_mode<synchronous>, transform_indices = @transform_11, window_bounds = array<i64: 1, 32>}, {transform_indices = @transform_12, window_bounds = array<i64: 1, 8, 32>}, {transform_indices = @transform_13, window_bounds = array<i64: 1, 8, 8>}]} {
    %c0 = arith.constant 0 : index
    %c0_0 = arith.constant 0 : index
    %c0_1 = arith.constant 0 : index
    %0 = vector.load %arg1[%c0, %c0_0, %c0_1] : memref<1x8x32xf32, #tpu.memory_space<vmem>>, vector<1x8x32xf32>
    %1 = vector.shape_cast %0 : vector<1x8x32xf32> to vector<8x32xf32>
    %c0_2 = arith.constant 0 : index
    %c0_3 = arith.constant 0 : index
    %c0_4 = arith.constant 0 : index
    %2 = vector.load %arg2[%c0_2, %c0_3, %c0_4] : memref<1x8x32xf32, #tpu.memory_space<vmem>>, vector<1x8x32xf32>
    %3 = vector.shape_cast %2 : vector<1x8x32xf32> to vector<8x32xf32>
    %c0_5 = arith.constant 0 : index
    %c0_6 = arith.constant 0 : index
    %c0_7 = arith.constant 0 : index
    %4 = vector.load %arg3[%c0_5, %c0_6, %c0_7] : memref<1x8x32xf32, #tpu.memory_space<vmem>>, vector<1x8x32xf32>
    %5 = vector.shape_cast %4 : vector<1x8x32xf32> to vector<8x32xf32>
    %c0_8 = arith.constant 0 : index
    %c0_9 = arith.constant 0 : index
    %c0_10 = arith.constant 0 : index
    %6 = vector.load %arg4[%c0_8, %c0_9, %c0_10] : memref<1x8x8xf32, #tpu.memory_space<vmem>>, vector<1x8x8xf32>
    %7 = vector.shape_cast %6 : vector<1x8x8xf32> to vector<8x8xf32>
    %c0_11 = arith.constant 0 : index
    %c0_12 = arith.constant 0 : index
    %8 = vector.load %arg5[%c0_11, %c0_12] : memref<32x32xf32, #tpu.memory_space<vmem>>, vector<32x32xf32>
    %cst = arith.constant dense<0.000000e+00> : vector<8x32xf32>
    %9 = tpu.matmul %1, %8, %cst {dimension_numbers = #tpu.dot_dimension_numbers<[1], [0], [0], [1], [0, 0, 1, 1], [], []>} : vector<8x32xf32>, vector<32x32xf32>, vector<8x32xf32> -> vector<8x32xf32>
    %c0_13 = arith.constant 0 : index
    %c0_14 = arith.constant 0 : index
    %10 = vector.load %arg6[%c0_13, %c0_14] : memref<1x32xf32, #tpu.memory_space<vmem>>, vector<1x32xf32>
    %11 = vector.broadcast %10 : vector<1x32xf32> to vector<8x32xf32>
    %12 = arith.addf %9, %11 : vector<8x32xf32>
    %c0_15 = arith.constant 0 : index
    %c0_16 = arith.constant 0 : index
    %13 = vector.load %arg7[%c0_15, %c0_16] : memref<32x32xf32, #tpu.memory_space<vmem>>, vector<32x32xf32>
    %cst_17 = arith.constant dense<0.000000e+00> : vector<8x32xf32>
    %14 = tpu.matmul %3, %13, %cst_17 {dimension_numbers = #tpu.dot_dimension_numbers<[1], [0], [0], [1], [0, 0, 1, 1], [], []>} : vector<8x32xf32>, vector<32x32xf32>, vector<8x32xf32> -> vector<8x32xf32>
    %c0_18 = arith.constant 0 : index
    %c0_19 = arith.constant 0 : index
    %15 = vector.load %arg8[%c0_18, %c0_19] : memref<1x32xf32, #tpu.memory_space<vmem>>, vector<1x32xf32>
    %16 = vector.broadcast %15 : vector<1x32xf32> to vector<8x32xf32>
    %17 = arith.addf %14, %16 : vector<8x32xf32>
    %c0_20 = arith.constant 0 : index
    %c0_21 = arith.constant 0 : index
    %18 = vector.load %arg9[%c0_20, %c0_21] : memref<32x32xf32, #tpu.memory_space<vmem>>, vector<32x32xf32>
    %cst_22 = arith.constant dense<0.000000e+00> : vector<8x32xf32>
    %19 = tpu.matmul %5, %18, %cst_22 {dimension_numbers = #tpu.dot_dimension_numbers<[1], [0], [0], [1], [0, 0, 1, 1], [], []>} : vector<8x32xf32>, vector<32x32xf32>, vector<8x32xf32> -> vector<8x32xf32>
    %c0_23 = arith.constant 0 : index
    %c0_24 = arith.constant 0 : index
    %20 = vector.load %arg10[%c0_23, %c0_24] : memref<1x32xf32, #tpu.memory_space<vmem>>, vector<1x32xf32>
    %21 = vector.broadcast %20 : vector<1x32xf32> to vector<8x32xf32>
    %22 = arith.addf %19, %21 : vector<8x32xf32>
    %cst_25 = arith.constant 0.353553385 : f32
    %23 = vector.broadcast %cst_25 : f32 to vector<8x32xf32>
    %24 = arith.mulf %12, %23 : vector<8x32xf32>
    %cst_26 = arith.constant 0.000000e+00 : f32
    %25 = vector.broadcast %cst_26 : f32 to vector<8x8xf32>
    %26 = arith.cmpf oeq, %7, %25 : vector<8x8xf32>
    %cst_27 = arith.constant 0.000000e+00 : f32
    %27 = vector.broadcast %cst_27 : f32 to vector<8x32xf32>
    %cst_28 = arith.constant 0.000000e+00 : f32
    %28 = vector.broadcast %cst_28 : f32 to vector<8x8xf32>
    %29 = vector.extract_strided_slice %24 {offsets = [0, 0], sizes = [8, 8], strides = [1, 1]} : vector<8x32xf32> to vector<8x8xf32>
    %30 = vector.extract_strided_slice %17 {offsets = [0, 0], sizes = [8, 8], strides = [1, 1]} : vector<8x32xf32> to vector<8x8xf32>
    %31 = vector.extract_strided_slice %22 {offsets = [0, 0], sizes = [8, 8], strides = [1, 1]} : vector<8x32xf32> to vector<8x8xf32>
    %cst_29 = arith.constant dense<0.000000e+00> : vector<8x8xf32>
    %32 = tpu.matmul %29, %30, %cst_29 {dimension_numbers = #tpu.dot_dimension_numbers<[1], [1], [0], [0], [0, 0, 1, 0], [], []>} : vector<8x8xf32>, vector<8x8xf32>, vector<8x8xf32> -> vector<8x8xf32>
    %cst_30 = arith.constant -1.000000e+09 : f32
    %33 = vector.broadcast %cst_30 : f32 to vector<8x8xf32>
    %34 = arith.select %26, %33, %32 : vector<8x8xi1>, vector<8x8xf32>
    %cst_31 = arith.constant dense<0xFF800000> : vector<8xf32>
    %35 = vector.multi_reduction <maximumf>, %34, %cst_31 [1] : vector<8x8xf32> to vector<8xf32>
    %36 = vector.shape_cast %35 : vector<8xf32> to vector<8x1xf32>
    %37 = vector.broadcast %36 : vector<8x1xf32> to vector<8x8xf32>
    %38 = arith.subf %34, %37 : vector<8x8xf32>
    %39 = math.exp %38 : vector<8x8xf32>
    %cst_32 = arith.constant dense<0.000000e+00> : vector<8xf32>
    %40 = vector.multi_reduction <add>, %39, %cst_32 [1] : vector<8x8xf32> to vector<8xf32>
    %41 = vector.shape_cast %40 : vector<8xf32> to vector<8x1xf32>
    %42 = vector.broadcast %41 : vector<8x1xf32> to vector<8x8xf32>
    %43 = arith.divf %39, %42 : vector<8x8xf32>
    %44 = arith.addf %28, %43 : vector<8x8xf32>
    %cst_33 = arith.constant dense<0.000000e+00> : vector<8x8xf32>
    %45 = tpu.matmul %43, %31, %cst_33 {dimension_numbers = #tpu.dot_dimension_numbers<[1], [0], [0], [1], [0, 0, 1, 1], [], []>} : vector<8x8xf32>, vector<8x8xf32>, vector<8x8xf32> -> vector<8x8xf32>
    %c0_34 = arith.constant 0 : index
    %c0_35 = arith.constant 0 : index
    %c0_36 = arith.constant 0 : index
    %46 = vector.load %arg11[%c0_34, %c0_35, %c0_36] : memref<4x8x32xf32, #tpu.memory_space<vmem>>, vector<1x8x32xf32>
    %47 = vector.shape_cast %46 : vector<1x8x32xf32> to vector<8x32xf32>
    %cst_37 = arith.constant dense<0.000000e+00> : vector<8x32xf32>
    %48 = tpu.matmul %45, %47, %cst_37 {dimension_numbers = #tpu.dot_dimension_numbers<[1], [0], [0], [1], [0, 0, 1, 1], [], []>} : vector<8x8xf32>, vector<8x32xf32>, vector<8x32xf32> -> vector<8x32xf32>
    %49 = arith.addf %27, %48 : vector<8x32xf32>
    %50 = vector.extract_strided_slice %24 {offsets = [0, 8], sizes = [8, 8], strides = [1, 1]} : vector<8x32xf32> to vector<8x8xf32>
    %51 = vector.extract_strided_slice %17 {offsets = [0, 8], sizes = [8, 8], strides = [1, 1]} : vector<8x32xf32> to vector<8x8xf32>
    %52 = vector.extract_strided_slice %22 {offsets = [0, 8], sizes = [8, 8], strides = [1, 1]} : vector<8x32xf32> to vector<8x8xf32>
    %cst_38 = arith.constant dense<0.000000e+00> : vector<8x8xf32>
    %53 = tpu.matmul %50, %51, %cst_38 {dimension_numbers = #tpu.dot_dimension_numbers<[1], [1], [0], [0], [0, 0, 1, 0], [], []>} : vector<8x8xf32>, vector<8x8xf32>, vector<8x8xf32> -> vector<8x8xf32>
    %cst_39 = arith.constant -1.000000e+09 : f32
    %54 = vector.broadcast %cst_39 : f32 to vector<8x8xf32>
    %55 = arith.select %26, %54, %53 : vector<8x8xi1>, vector<8x8xf32>
    %cst_40 = arith.constant dense<0xFF800000> : vector<8xf32>
    %56 = vector.multi_reduction <maximumf>, %55, %cst_40 [1] : vector<8x8xf32> to vector<8xf32>
    %57 = vector.shape_cast %56 : vector<8xf32> to vector<8x1xf32>
    %58 = vector.broadcast %57 : vector<8x1xf32> to vector<8x8xf32>
    %59 = arith.subf %55, %58 : vector<8x8xf32>
    %60 = math.exp %59 : vector<8x8xf32>
    %cst_41 = arith.constant dense<0.000000e+00> : vector<8xf32>
    %61 = vector.multi_reduction <add>, %60, %cst_41 [1] : vector<8x8xf32> to vector<8xf32>
    %62 = vector.shape_cast %61 : vector<8xf32> to vector<8x1xf32>
    %63 = vector.broadcast %62 : vector<8x1xf32> to vector<8x8xf32>
    %64 = arith.divf %60, %63 : vector<8x8xf32>
    %65 = arith.addf %44, %64 : vector<8x8xf32>
    %cst_42 = arith.constant dense<0.000000e+00> : vector<8x8xf32>
    %66 = tpu.matmul %64, %52, %cst_42 {dimension_numbers = #tpu.dot_dimension_numbers<[1], [0], [0], [1], [0, 0, 1, 1], [], []>} : vector<8x8xf32>, vector<8x8xf32>, vector<8x8xf32> -> vector<8x8xf32>
    %c1 = arith.constant 1 : index
    %c0_43 = arith.constant 0 : index
    %c0_44 = arith.constant 0 : index
    %67 = vector.load %arg11[%c1, %c0_43, %c0_44] : memref<4x8x32xf32, #tpu.memory_space<vmem>>, vector<1x8x32xf32>
    %68 = vector.shape_cast %67 : vector<1x8x32xf32> to vector<8x32xf32>
    %cst_45 = arith.constant dense<0.000000e+00> : vector<8x32xf32>
    %69 = tpu.matmul %66, %68, %cst_45 {dimension_numbers = #tpu.dot_dimension_numbers<[1], [0], [0], [1], [0, 0, 1, 1], [], []>} : vector<8x8xf32>, vector<8x32xf32>, vector<8x32xf32> -> vector<8x32xf32>
    %70 = arith.addf %49, %69 : vector<8x32xf32>
    %71 = vector.extract_strided_slice %24 {offsets = [0, 16], sizes = [8, 8], strides = [1, 1]} : vector<8x32xf32> to vector<8x8xf32>
    %72 = vector.extract_strided_slice %17 {offsets = [0, 16], sizes = [8, 8], strides = [1, 1]} : vector<8x32xf32> to vector<8x8xf32>
    %73 = vector.extract_strided_slice %22 {offsets = [0, 16], sizes = [8, 8], strides = [1, 1]} : vector<8x32xf32> to vector<8x8xf32>
    %cst_46 = arith.constant dense<0.000000e+00> : vector<8x8xf32>
    %74 = tpu.matmul %71, %72, %cst_46 {dimension_numbers = #tpu.dot_dimension_numbers<[1], [1], [0], [0], [0, 0, 1, 0], [], []>} : vector<8x8xf32>, vector<8x8xf32>, vector<8x8xf32> -> vector<8x8xf32>
    %cst_47 = arith.constant -1.000000e+09 : f32
    %75 = vector.broadcast %cst_47 : f32 to vector<8x8xf32>
    %76 = arith.select %26, %75, %74 : vector<8x8xi1>, vector<8x8xf32>
    %cst_48 = arith.constant dense<0xFF800000> : vector<8xf32>
    %77 = vector.multi_reduction <maximumf>, %76, %cst_48 [1] : vector<8x8xf32> to vector<8xf32>
    %78 = vector.shape_cast %77 : vector<8xf32> to vector<8x1xf32>
    %79 = vector.broadcast %78 : vector<8x1xf32> to vector<8x8xf32>
    %80 = arith.subf %76, %79 : vector<8x8xf32>
    %81 = math.exp %80 : vector<8x8xf32>
    %cst_49 = arith.constant dense<0.000000e+00> : vector<8xf32>
    %82 = vector.multi_reduction <add>, %81, %cst_49 [1] : vector<8x8xf32> to vector<8xf32>
    %83 = vector.shape_cast %82 : vector<8xf32> to vector<8x1xf32>
    %84 = vector.broadcast %83 : vector<8x1xf32> to vector<8x8xf32>
    %85 = arith.divf %81, %84 : vector<8x8xf32>
    %86 = arith.addf %65, %85 : vector<8x8xf32>
    %cst_50 = arith.constant dense<0.000000e+00> : vector<8x8xf32>
    %87 = tpu.matmul %85, %73, %cst_50 {dimension_numbers = #tpu.dot_dimension_numbers<[1], [0], [0], [1], [0, 0, 1, 1], [], []>} : vector<8x8xf32>, vector<8x8xf32>, vector<8x8xf32> -> vector<8x8xf32>
    %c2 = arith.constant 2 : index
    %c0_51 = arith.constant 0 : index
    %c0_52 = arith.constant 0 : index
    %88 = vector.load %arg11[%c2, %c0_51, %c0_52] : memref<4x8x32xf32, #tpu.memory_space<vmem>>, vector<1x8x32xf32>
    %89 = vector.shape_cast %88 : vector<1x8x32xf32> to vector<8x32xf32>
    %cst_53 = arith.constant dense<0.000000e+00> : vector<8x32xf32>
    %90 = tpu.matmul %87, %89, %cst_53 {dimension_numbers = #tpu.dot_dimension_numbers<[1], [0], [0], [1], [0, 0, 1, 1], [], []>} : vector<8x8xf32>, vector<8x32xf32>, vector<8x32xf32> -> vector<8x32xf32>
    %91 = arith.addf %70, %90 : vector<8x32xf32>
    %92 = vector.extract_strided_slice %24 {offsets = [0, 24], sizes = [8, 8], strides = [1, 1]} : vector<8x32xf32> to vector<8x8xf32>
    %93 = vector.extract_strided_slice %17 {offsets = [0, 24], sizes = [8, 8], strides = [1, 1]} : vector<8x32xf32> to vector<8x8xf32>
    %94 = vector.extract_strided_slice %22 {offsets = [0, 24], sizes = [8, 8], strides = [1, 1]} : vector<8x32xf32> to vector<8x8xf32>
    %cst_54 = arith.constant dense<0.000000e+00> : vector<8x8xf32>
    %95 = tpu.matmul %92, %93, %cst_54 {dimension_numbers = #tpu.dot_dimension_numbers<[1], [1], [0], [0], [0, 0, 1, 0], [], []>} : vector<8x8xf32>, vector<8x8xf32>, vector<8x8xf32> -> vector<8x8xf32>
    %cst_55 = arith.constant -1.000000e+09 : f32
    %96 = vector.broadcast %cst_55 : f32 to vector<8x8xf32>
    %97 = arith.select %26, %96, %95 : vector<8x8xi1>, vector<8x8xf32>
    %cst_56 = arith.constant dense<0xFF800000> : vector<8xf32>
    %98 = vector.multi_reduction <maximumf>, %97, %cst_56 [1] : vector<8x8xf32> to vector<8xf32>
    %99 = vector.shape_cast %98 : vector<8xf32> to vector<8x1xf32>
    %100 = vector.broadcast %99 : vector<8x1xf32> to vector<8x8xf32>
    %101 = arith.subf %97, %100 : vector<8x8xf32>
    %102 = math.exp %101 : vector<8x8xf32>
    %cst_57 = arith.constant dense<0.000000e+00> : vector<8xf32>
    %103 = vector.multi_reduction <add>, %102, %cst_57 [1] : vector<8x8xf32> to vector<8xf32>
    %104 = vector.shape_cast %103 : vector<8xf32> to vector<8x1xf32>
    %105 = vector.broadcast %104 : vector<8x1xf32> to vector<8x8xf32>
    %106 = arith.divf %102, %105 : vector<8x8xf32>
    %107 = arith.addf %86, %106 : vector<8x8xf32>
    %cst_58 = arith.constant dense<0.000000e+00> : vector<8x8xf32>
    %108 = tpu.matmul %106, %94, %cst_58 {dimension_numbers = #tpu.dot_dimension_numbers<[1], [0], [0], [1], [0, 0, 1, 1], [], []>} : vector<8x8xf32>, vector<8x8xf32>, vector<8x8xf32> -> vector<8x8xf32>
    %c3 = arith.constant 3 : index
    %c0_59 = arith.constant 0 : index
    %c0_60 = arith.constant 0 : index
    %109 = vector.load %arg11[%c3, %c0_59, %c0_60] : memref<4x8x32xf32, #tpu.memory_space<vmem>>, vector<1x8x32xf32>
    %110 = vector.shape_cast %109 : vector<1x8x32xf32> to vector<8x32xf32>
    %cst_61 = arith.constant dense<0.000000e+00> : vector<8x32xf32>
    %111 = tpu.matmul %108, %110, %cst_61 {dimension_numbers = #tpu.dot_dimension_numbers<[1], [0], [0], [1], [0, 0, 1, 1], [], []>} : vector<8x8xf32>, vector<8x32xf32>, vector<8x32xf32> -> vector<8x32xf32>
    %112 = arith.addf %91, %111 : vector<8x32xf32>
    %c0_62 = arith.constant 0 : index
    %c0_63 = arith.constant 0 : index
    %113 = vector.load %arg12[%c0_62, %c0_63] : memref<1x32xf32, #tpu.memory_space<vmem>>, vector<1x32xf32>
    %114 = vector.broadcast %113 : vector<1x32xf32> to vector<8x32xf32>
    %115 = arith.addf %112, %114 : vector<8x32xf32>
    %c0_64 = arith.constant 0 : index
    %c0_65 = arith.constant 0 : index
    %c0_66 = arith.constant 0 : index
    %116 = vector.load %arg13[%c0_64, %c0_65, %c0_66] : memref<1x8x32xf32, #tpu.memory_space<vmem>>, vector<1x8x32xf32>
    %117 = vector.shape_cast %116 : vector<1x8x32xf32> to vector<8x32xf32>
    %118 = vector.shape_cast %115 : vector<8x32xf32> to vector<1x8x32xf32>
    tpu.vector_store %arg13[%c0_64, %c0_65, %c0_66], %118 {strides = array<i32>} : memref<1x8x32xf32, #tpu.memory_space<vmem>>, vector<1x8x32xf32>,
    %cst_67 = arith.constant 2.500000e-01 : f32
    %119 = vector.broadcast %cst_67 : f32 to vector<8x8xf32>
    %120 = arith.mulf %107, %119 : vector<8x8xf32>
    %c0_68 = arith.constant 0 : index
    %c0_69 = arith.constant 0 : index
    %c0_70 = arith.constant 0 : index
    %121 = vector.load %arg14[%c0_68, %c0_69, %c0_70] : memref<1x8x8xf32, #tpu.memory_space<vmem>>, vector<1x8x8xf32>
    %122 = vector.shape_cast %121 : vector<1x8x8xf32> to vector<8x8xf32>
    %123 = vector.shape_cast %120 : vector<8x8xf32> to vector<1x8x8xf32>
    tpu.vector_store %arg14[%c0_68, %c0_69, %c0_70], %123 {strides = array<i32>} : memref<1x8x8xf32, #tpu.memory_space<vmem>>, vector<1x8x8xf32>,
    return
  }
  func.func @transform_0(%arg0: i32) -> (i32, i32, i32) {
    %c0_i32 = arith.constant 0 : i32
    %c0_i32_0 = arith.constant 0 : i32
    %c0_i32_1 = arith.constant 0 : i32
    return %arg0, %c0_i32, %c0_i32_0 : i32, i32, i32
  }
  func.func @transform_1(%arg0: i32) -> (i32, i32, i32) {
    %c0_i32 = arith.constant 0 : i32
    %c0_i32_0 = arith.constant 0 : i32
    %c0_i32_1 = arith.constant 0 : i32
    return %arg0, %c0_i32, %c0_i32_0 : i32, i32, i32
  }
  func.func @transform_2(%arg0: i32) -> (i32, i32, i32) {
    %c0_i32 = arith.constant 0 : i32
    %c0_i32_0 = arith.constant 0 : i32
    %c0_i32_1 = arith.constant 0 : i32
    return %arg0, %c0_i32, %c0_i32_0 : i32, i32, i32
  }
  func.func @transform_3(%arg0: i32) -> (i32, i32, i32) {
    %c0_i32 = arith.constant 0 : i32
    %c0_i32_0 = arith.constant 0 : i32
    %c0_i32_1 = arith.constant 0 : i32
    return %arg0, %c0_i32, %c0_i32_0 : i32, i32, i32
  }
  func.func @transform_4(%arg0: i32) -> (i32, i32) {
    %c0_i32 = arith.constant 0 : i32
    %c0_i32_0 = arith.constant 0 : i32
    %c0_i32_1 = arith.constant 0 : i32
    return %c0_i32, %c0_i32_0 : i32, i32
  }
  func.func @transform_5(%arg0: i32) -> (i32, i32) {
    %c0_i32 = arith.constant 0 : i32
    %c0_i32_0 = arith.constant 0 : i32
    %c0_i32_1 = arith.constant 0 : i32
    return %c0_i32, %c0_i32_0 : i32, i32
  }
  func.func @transform_6(%arg0: i32) -> (i32, i32) {
    %c0_i32 = arith.constant 0 : i32
    %c0_i32_0 = arith.constant 0 : i32
    %c0_i32_1 = arith.constant 0 : i32
    return %c0_i32, %c0_i32_0 : i32, i32
  }
  func.func @transform_7(%arg0: i32) -> (i32, i32) {
    %c0_i32 = arith.constant 0 : i32
    %c0_i32_0 = arith.constant 0 : i32
    %c0_i32_1 = arith.constant 0 : i32
    return %c0_i32, %c0_i32_0 : i32, i32
  }
  func.func @transform_8(%arg0: i32) -> (i32, i32) {
    %c0_i32 = arith.constant 0 : i32
    %c0_i32_0 = arith.constant 0 : i32
    %c0_i32_1 = arith.constant 0 : i32
    return %c0_i32, %c0_i32_0 : i32, i32
  }
  func.func @transform_9(%arg0: i32) -> (i32, i32) {
    %c0_i32 = arith.constant 0 : i32
    %c0_i32_0 = arith.constant 0 : i32
    %c0_i32_1 = arith.constant 0 : i32
    return %c0_i32, %c0_i32_0 : i32, i32
  }
  func.func @transform_10(%arg0: i32) -> (i32, i32, i32) {
    %c0_i32 = arith.constant 0 : i32
    %c0_i32_0 = arith.constant 0 : i32
    %c0_i32_1 = arith.constant 0 : i32
    %c0_i32_2 = arith.constant 0 : i32
    return %c0_i32, %c0_i32_0, %c0_i32_1 : i32, i32, i32
  }
  func.func @transform_11(%arg0: i32) -> (i32, i32) {
    %c0_i32 = arith.constant 0 : i32
    %c0_i32_0 = arith.constant 0 : i32
    %c0_i32_1 = arith.constant 0 : i32
    return %c0_i32, %c0_i32_0 : i32, i32
  }
  func.func @transform_12(%arg0: i32) -> (i32, i32, i32) {
    %c0_i32 = arith.constant 0 : i32
    %c0_i32_0 = arith.constant 0 : i32
    %c0_i32_1 = arith.constant 0 : i32
    return %arg0, %c0_i32, %c0_i32_0 : i32, i32, i32
  }
  func.func @transform_13(%arg0: i32) -> (i32, i32, i32) {
    %c0_i32 = arith.constant 0 : i32
    %c0_i32_0 = arith.constant 0 : i32
    %c0_i32_1 = arith.constant 0 : i32
    return %arg0, %c0_i32, %c0_i32_0 : i32, i32, i32
  }
}

</mosaic_0001>

<llo_original>
// kernel: tpu_custom_call.1
$region0: #{tpu_custom_call.1}
  #allocation0 [shape = 'u32[]', space=smem, size = 0x4, offset = 0x4, fixed_abs, tag = 'smem constant byte address 0x4 - core index']
  #allocation1 [shape = 'u32[144,128]{1,0:T(1,128)}', space=vmem, size = 0x12000, scoped, tag = 'internal scratch']
  %s0 = inlined_call_operand.hbm [shape: f32[2,8,32], index: 0, kind: input, shape index: {}]
  %s1 = inlined_call_operand.hbm [shape: f32[2,8,32], index: 1, kind: input, shape index: {}]
  %s2 = inlined_call_operand.hbm [shape: f32[2,8,32], index: 2, kind: input, shape index: {}]
  %s3 = inlined_call_operand.hbm [shape: f32[2,8,8], index: 3, kind: input, shape index: {}]
  %s4 = inlined_call_operand.hbm [shape: f32[32,32], index: 4, kind: input, shape index: {}]
  %s5 = inlined_call_operand.vmem [shape: f32[1,32], index: 5, kind: input, shape index: {}]
  %s6 = inlined_call_operand.hbm [shape: f32[32,32], index: 6, kind: input, shape index: {}]
  %s7 = inlined_call_operand.vmem [shape: f32[1,32], index: 7, kind: input, shape index: {}]
  %s8 = inlined_call_operand.hbm [shape: f32[32,32], index: 8, kind: input, shape index: {}]
  %s9 = inlined_call_operand.vmem [shape: f32[1,32], index: 9, kind: input, shape index: {}]
  %s10 = inlined_call_operand.hbm [shape: f32[4,8,32], index: 10, kind: input, shape index: {}]
  %s11 = inlined_call_operand.vmem [shape: f32[1,32], index: 11, kind: input, shape index: {}]
  %s12 = inlined_call_operand.hbm [shape: f32[2,8,32], index: 12, kind: output, shape index: {0}]
  %s13 = inlined_call_operand.hbm [shape: f32[2,8,8], index: 13, kind: output, shape index: {1}]
  %14 = xla_tuple %s12, %s13
  %s15 = sld [smem:[#allocation0]]
  $region121: #{tpu_custom_call.1} parent=0
    _
  %s17 = ssub.s32 1, %s15
  %s18 = scalar_select 0, %s17, %s15
  $region1: #{tpu_custom_call.1} parent=0
    #allocation2 [shape = 'u8[8192]{0}', space=vmem, size = 0x2000, scoped, tag = 'input window, operand 0']
    #allocation3 [shape = 's32[2]{0}', space=sflag, size = 0x8, scoped, tag = 'scoped memory for tpu_custom_call.1']
    #allocation4 [shape = 's32[2]{0}', space=sflag, size = 0x8, scoped, tag = 'scoped memory for tpu_custom_call.1']
    #allocation5 [shape = 'u8[8192]{0}', space=vmem, size = 0x2000, scoped, tag = 'input window, operand 1']
    #allocation6 [shape = 's32[2]{0}', space=sflag, size = 0x8, scoped, tag = 'scoped memory for tpu_custom_call.1']
    #allocation7 [shape = 'u8[8192]{0}', space=vmem, size = 0x2000, scoped, tag = 'input window, operand 2']
    #allocation8 [shape = 'u8[8192]{0}', space=vmem, size = 0x2000, scoped, tag = 'input window, operand 3']
    #allocation9 [shape = 's32[2]{0}', space=sflag, size = 0x8, scoped, tag = 'scoped memory for tpu_custom_call.1']
    #allocation10 [shape = 'u8[16384]{0}', space=vmem, size = 0x4000, scoped, tag = 'input window, operand 4, single buffered']
    #allocation11 [shape = 'u8[16384]{0}', space=vmem, size = 0x4000, scoped, tag = 'input window, operand 6, single buffered']
    #allocation12 [shape = 's32[1]{0}', space=sflag, size = 0x4, scoped, tag = 'scoped memory for tpu_custom_call.1']
    #allocation13 [shape = 'u8[16384]{0}', space=vmem, size = 0x4000, scoped, tag = 'input window, operand 8, single buffered']
    #allocation14 [shape = 'u8[16384]{0}', space=vmem, size = 0x4000, scoped, tag = 'input window, operand 10, single buffered']
    #allocation15 [shape = 's32[1]{0}', space=sflag, size = 0x4, scoped, tag = 'scoped memory for tpu_custom_call.1']
    #allocation16 [shape = 'u8[8192]{0}', space=vmem, size = 0x2000, scoped, tag = 'output window, operand 0']
    #allocation17 [shape = 'u8[8192]{0}', space=vmem, size = 0x2000, scoped, tag = 'output window, operand 1']
    #allocation18 [shape = 's32[2]{0}', space=sflag, size = 0x8, scoped, tag = 'scoped memory for tpu_custom_call.1']
    %19 = vsyncpa [#allocation3], 0
    %s20 = scalar_lea.sflag [#allocation3], 1
    %21 = vsyncpa %s20, 0
    %22 = vsyncpa [#allocation6], 0
    %s23 = scalar_lea.sflag [#allocation6], 1
    %24 = vsyncpa %s23, 0
    %25 = vsyncpa [#allocation9], 0
    %s26 = scalar_lea.sflag [#allocation9], 1
    %27 = vsyncpa %s26, 0
    %28 = vsyncpa [#allocation12], 0
    %29 = vsyncpa [#allocation15], 0
    %30 = vsyncpa [#allocation4], 0
    %s31 = scalar_lea.sflag [#allocation4], 1
    %32 = vsyncpa %s31, 0
    %33 = vsyncpa [#allocation18], 0
    %s34 = scalar_lea.sflag [#allocation18], 1
    %35 = vsyncpa %s34, 0
    loop: start=0, step=1, limit=4
    $region2: #{tpu_custom_call.1} parent=1 // loop_pre_header
      _
    $region3: #{tpu_custom_call.1} parent=1 // loop_header
      %s37 = sphi 0, %s41
      %p38 = scmp.ge.s32.totalorder %s37, 4
      %s47 = sphi 0, %s49
      %s50 = sphi 0, %s47
      %s51 = sphi 0, %s50
      %s67 = sphi 0, %s51
      %s73 = sphi 0, %s75
      %s76 = sphi 0, %s73
      %s77 = sphi 0, %s76
      %s93 = sphi 0, %s77
      %s99 = sphi 0, %s101
      %s102 = sphi 0, %s99
      %s103 = sphi 0, %s102
      %s119 = sphi 0, %s103
      %s125 = sphi 0, %s127
      %s128 = sphi 0, %s125
      %s129 = sphi 0, %s128
      %s145 = sphi 0, %s129
      %s149 = sphi 0, %s149
      %s151 = sphi 0, %s149
      %s152 = sphi 0, %s151
      %s166 = sphi 0, %s152
      %s170 = sphi 0, %s170
      %s172 = sphi 0, %s170
      %s173 = sphi 0, %s172
      %s187 = sphi 0, %s173
      %s191 = sphi 0, %s191
      %s193 = sphi 0, %s191
      %s194 = sphi 0, %s193
      %s208 = sphi 0, %s194
      %s212 = sphi 0, %s212
      %s214 = sphi 0, %s212
      %s215 = sphi 0, %s214
      %s229 = sphi 0, %s215
      %s233 = sphi 0, %s233
      %s235 = sphi 0, %s233
      %s236 = sphi 0, %s235
      %s250 = sphi 0, %s236
      %s254 = sphi 0, %s254
      %s256 = sphi 0, %s254
      %s257 = sphi 0, %s256
      %s271 = sphi 0, %s257
      %s275 = sphi 0, %s275
      %s277 = sphi 0, %s275
      %s278 = sphi 0, %s277
      %s292 = sphi 0, %s278
      %s296 = sphi 0, %s296
      %s298 = sphi 0, %s296
      %s299 = sphi 0, %s298
      %s313 = sphi 0, %s299
      %s319 = sphi 0, %s321
      %s322 = sphi 0, %s319
      %s323 = sphi 0, %s322
      %s339 = sphi 0, %s323
      %s345 = sphi 0, %s347
      %s348 = sphi 0, %s345
      %s349 = sphi 0, %s348
      %s365 = sphi 0, %s349
    $region4: #{tpu_custom_call.1} parent=1 // loop_header_branch
      %40 = sbr.rel (%p38) target = $region8
    $region5: #{tpu_custom_call.1} parent=1 // loop_body
      %s42 = ssub.s32 %s37, 1
      %s43 = ssub.s32 %s37, 2
      %s44 = sadd.s32 %s37, 1
      %s45 = ssub.s32 %s37, %s44
      %p46 = scmp.eq.s32.totalorder %s45, 0
      %s48 = sadd.s32 %s47, 1
      %s49 = scalar_select %p46, %s47, %s48
      %p52 = pneg %p46
      %p53 = scmp.eq.s32.totalorder %s37, 1
      %p54 = por %p52, %p53
      %p55 = scmp.ne.s32.totalorder %s47, %s50
      %p56 = scmp.eq.s32.totalorder %s37, 0
      %p57 = por %p55, %p56
      %p58 = scmp.ne.s32.totalorder %s47, %s50
      %p59 = scmp.eq.s32.totalorder %s42, 1
      %p60 = por %p58, %p59
      %p61 = scmp.ne.s32.totalorder %s50, %s51
      %p62 = scmp.eq.s32.totalorder %s42, 0
      %p63 = por %p61, %p62
      %p64 = scmp.ne.s32.totalorder %s50, %s51
      %p65 = scmp.eq.s32.totalorder %s43, 1
      %p66 = por %p64, %p65
      %p68 = scmp.ne.s32.totalorder %s51, %s67
      %p69 = scmp.eq.s32.totalorder %s43, 0
      %p70 = por %p68, %p69
      %s71 = ssub.s32 %s37, %s44
      %p72 = scmp.eq.s32.totalorder %s71, 0
      %s74 = sadd.s32 %s73, 1
      %s75 = scalar_select %p72, %s73, %s74
      %p78 = pneg %p72
      %p79 = scmp.eq.s32.totalorder %s37, 1
      %p80 = por %p78, %p79
      %p81 = scmp.ne.s32.totalorder %s73, %s76
      %p82 = scmp.eq.s32.totalorder %s37, 0
      %p83 = por %p81, %p82
      %p84 = scmp.ne.s32.totalorder %s73, %s76
      %p85 = scmp.eq.s32.totalorder %s42, 1
      %p86 = por %p84, %p85
      %p87 = scmp.ne.s32.totalorder %s76, %s77
      %p88 = scmp.eq.s32.totalorder %s42, 0
      %p89 = por %p87, %p88
      %p90 = scmp.ne.s32.totalorder %s76, %s77
      %p91 = scmp.eq.s32.totalorder %s43, 1
      %p92 = por %p90, %p91
      %p94 = scmp.ne.s32.totalorder %s77, %s93
      %p95 = scmp.eq.s32.totalorder %s43, 0
      %p96 = por %p94, %p95
      %s97 = ssub.s32 %s37, %s44
      %p98 = scmp.eq.s32.totalorder %s97, 0
      %s100 = sadd.s32 %s99, 1
      %s101 = scalar_select %p98, %s99, %s100
      %p104 = pneg %p98
      %p105 = scmp.eq.s32.totalorder %s37, 1
      %p106 = por %p104, %p105
      %p107 = scmp.ne.s32.totalorder %s99, %s102
      %p108 = scmp.eq.s32.totalorder %s37, 0
      %p109 = por %p107, %p108
      %p110 = scmp.ne.s32.totalorder %s99, %s102
      %p111 = scmp.eq.s32.totalorder %s42, 1
      %p112 = por %p110, %p111
      %p113 = scmp.ne.s32.totalorder %s102, %s103
      %p114 = scmp.eq.s32.totalorder %s42, 0
      %p115 = por %p113, %p114
      %p116 = scmp.ne.s32.totalorder %s102, %s103
      %p117 = scmp.eq.s32.totalorder %s43, 1
      %p118 = por %p116, %p117
      %p120 = scmp.ne.s32.totalorder %s103, %s119
      %p121 = scmp.eq.s32.totalorder %s43, 0
      %p122 = por %p120, %p121
      %s123 = ssub.s32 %s37, %s44
      %p124 = scmp.eq.s32.totalorder %s123, 0
      %s126 = sadd.s32 %s125, 1
      %s127 = scalar_select %p124, %s125, %s126
      %p130 = pneg %p124
      %p131 = scmp.eq.s32.totalorder %s37, 1
      %p132 = por %p130, %p131
      %p133 = scmp.ne.s32.totalorder %s125, %s128
      %p134 = scmp.eq.s32.totalorder %s37, 0
      %p135 = por %p133, %p134
      %p136 = scmp.ne.s32.totalorder %s125, %s128
      %p137 = scmp.eq.s32.totalorder %s42, 1
      %p138 = por %p136, %p137
      %p139 = scmp.ne.s32.totalorder %s128, %s129
      %p140 = scmp.eq.s32.totalorder %s42, 0
      %p141 = por %p139, %p140
      %p142 = scmp.ne.s32.totalorder %s128, %s129
      %p143 = scmp.eq.s32.totalorder %s43, 1
      %p144 = por %p142, %p143
      %p146 = scmp.ne.s32.totalorder %s129, %s145
      %p147 = scmp.eq.s32.totalorder %s43, 0
      %p148 = por %p146, %p147
      %s150 = sadd.s32 %s149, 1
      %p153 = scmp.eq.s32.totalorder %s37, 1
      %p154 = scmp.ne.s32.totalorder %s149, %s151
      %p155 = scmp.eq.s32.totalorder %s37, 0
      %p156 = por %p154, %p155
      %p157 = scmp.ne.s32.totalorder %s149, %s151
      %p158 = scmp.eq.s32.totalorder %s42, 1
      %p159 = por %p157, %p158
      %p160 = scmp.ne.s32.totalorder %s151, %s152
      %p161 = scmp.eq.s32.totalorder %s42, 0
      %p162 = por %p160, %p161
      %p163 = scmp.ne.s32.totalorder %s151, %s152
      %p164 = scmp.eq.s32.totalorder %s43, 1
      %p165 = por %p163, %p164
      %p167 = scmp.ne.s32.totalorder %s152, %s166
      %p168 = scmp.eq.s32.totalorder %s43, 0
      %p169 = por %p167, %p168
      %s171 = sadd.s32 %s170, 1
      %p174 = scmp.eq.s32.totalorder %s37, 1
      %p175 = scmp.ne.s32.totalorder %s170, %s172
      %p176 = scmp.eq.s32.totalorder %s37, 0
      %p177 = por %p175, %p176
      %p178 = scmp.ne.s32.totalorder %s170, %s172
      %p179 = scmp.eq.s32.totalorder %s42, 1
      %p180 = por %p178, %p179
      %p181 = scmp.ne.s32.totalorder %s172, %s173
      %p182 = scmp.eq.s32.totalorder %s42, 0
      %p183 = por %p181, %p182
      %p184 = scmp.ne.s32.totalorder %s172, %s173
      %p185 = scmp.eq.s32.totalorder %s43, 1
      %p186 = por %p184, %p185
      %p188 = scmp.ne.s32.totalorder %s173, %s187
      %p189 = scmp.eq.s32.totalorder %s43, 0
      %p190 = por %p188, %p189
      %s192 = sadd.s32 %s191, 1
      %p195 = scmp.eq.s32.totalorder %s37, 1
      %p196 = scmp.ne.s32.totalorder %s191, %s193
      %p197 = scmp.eq.s32.totalorder %s37, 0
      %p198 = por %p196, %p197
      %p199 = scmp.ne.s32.totalorder %s191, %s193
      %p200 = scmp.eq.s32.totalorder %s42, 1
      %p201 = por %p199, %p200
      %p202 = scmp.ne.s32.totalorder %s193, %s194
      %p203 = scmp.eq.s32.totalorder %s42, 0
      %p204 = por %p202, %p203
      %p205 = scmp.ne.s32.totalorder %s193, %s194
      %p206 = scmp.eq.s32.totalorder %s43, 1
      %p207 = por %p205, %p206
      %p209 = scmp.ne.s32.totalorder %s194, %s208
      %p210 = scmp.eq.s32.totalorder %s43, 0
      %p211 = por %p209, %p210
      %s213 = sadd.s32 %s212, 1
      %p216 = scmp.eq.s32.totalorder %s37, 1
      %p217 = scmp.ne.s32.totalorder %s212, %s214
      %p218 = scmp.eq.s32.totalorder %s37, 0
      %p219 = por %p217, %p218
      %p220 = scmp.ne.s32.totalorder %s212, %s214
      %p221 = scmp.eq.s32.totalorder %s42, 1
      %p222 = por %p220, %p221
      %p223 = scmp.ne.s32.totalorder %s214, %s215
      %p224 = scmp.eq.s32.totalorder %s42, 0
      %p225 = por %p223, %p224
      %p226 = scmp.ne.s32.totalorder %s214, %s215
      %p227 = scmp.eq.s32.totalorder %s43, 1
      %p228 = por %p226, %p227
      %p230 = scmp.ne.s32.totalorder %s215, %s229
      %p231 = scmp.eq.s32.totalorder %s43, 0
      %p232 = por %p230, %p231
      %s234 = sadd.s32 %s233, 1
      %p237 = scmp.eq.s32.totalorder %s37, 1
      %p238 = scmp.ne.s32.totalorder %s233, %s235
      %p239 = scmp.eq.s32.totalorder %s37, 0
      %p240 = por %p238, %p239
      %p241 = scmp.ne.s32.totalorder %s233, %s235
      %p242 = scmp.eq.s32.totalorder %s42, 1
      %p243 = por %p241, %p242
      %p244 = scmp.ne.s32.totalorder %s235, %s236
      %p245 = scmp.eq.s32.totalorder %s42, 0
      %p246 = por %p244, %p245
      %p247 = scmp.ne.s32.totalorder %s235, %s236
      %p248 = scmp.eq.s32.totalorder %s43, 1
      %p249 = por %p247, %p248
      %p251 = scmp.ne.s32.totalorder %s236, %s250
      %p252 = scmp.eq.s32.totalorder %s43, 0
      %p253 = por %p251, %p252
      %s255 = sadd.s32 %s254, 1
      %p258 = scmp.eq.s32.totalorder %s37, 1
      %p259 = scmp.ne.s32.totalorder %s254, %s256
      %p260 = scmp.eq.s32.totalorder %s37, 0
      %p261 = por %p259, %p260
      %p262 = scmp.ne.s32.totalorder %s254, %s256
      %p263 = scmp.eq.s32.totalorder %s42, 1
      %p264 = por %p262, %p263
      %p265 = scmp.ne.s32.totalorder %s256, %s257
      %p266 = scmp.eq.s32.totalorder %s42, 0
      %p267 = por %p265, %p266
      %p268 = scmp.ne.s32.totalorder %s256, %s257
      %p269 = scmp.eq.s32.totalorder %s43, 1
      %p270 = por %p268, %p269
      %p272 = scmp.ne.s32.totalorder %s257, %s271
      %p273 = scmp.eq.s32.totalorder %s43, 0
      %p274 = por %p272, %p273
      %s276 = sadd.s32 %s275, 1
      %p279 = scmp.eq.s32.totalorder %s37, 1
      %p280 = scmp.ne.s32.totalorder %s275, %s277
      %p281 = scmp.eq.s32.totalorder %s37, 0
      %p282 = por %p280, %p281
      %p283 = scmp.ne.s32.totalorder %s275, %s277
      %p284 = scmp.eq.s32.totalorder %s42, 1
      %p285 = por %p283, %p284
      %p286 = scmp.ne.s32.totalorder %s277, %s278
      %p287 = scmp.eq.s32.totalorder %s42, 0
      %p288 = por %p286, %p287
      %p289 = scmp.ne.s32.totalorder %s277, %s278
      %p290 = scmp.eq.s32.totalorder %s43, 1
      %p291 = por %p289, %p290
      %p293 = scmp.ne.s32.totalorder %s278, %s292
      %p294 = scmp.eq.s32.totalorder %s43, 0
      %p295 = por %p293, %p294
      %s297 = sadd.s32 %s296, 1
      %p300 = scmp.eq.s32.totalorder %s37, 1
      %p301 = scmp.ne.s32.totalorder %s296, %s298
      %p302 = scmp.eq.s32.totalorder %s37, 0
      %p303 = por %p301, %p302
      %p304 = scmp.ne.s32.totalorder %s296, %s298
      %p305 = scmp.eq.s32.totalorder %s42, 1
      %p306 = por %p304, %p305
      %p307 = scmp.ne.s32.totalorder %s298, %s299
      %p308 = scmp.eq.s32.totalorder %s42, 0
      %p309 = por %p307, %p308
      %p310 = scmp.ne.s32.totalorder %s298, %s299
      %p311 = scmp.eq.s32.totalorder %s43, 1
      %p312 = por %p310, %p311
      %p314 = scmp.ne.s32.totalorder %s299, %s313
      %p315 = scmp.eq.s32.totalorder %s43, 0
      %p316 = por %p314, %p315
      %s317 = ssub.s32 %s37, %s44
      %p318 = scmp.eq.s32.totalorder %s317, 0
      %s320 = sadd.s32 %s319, 1
      %s321 = scalar_select %p318, %s319, %s320
      %p324 = pneg %p318
      %p325 = scmp.eq.s32.totalorder %s37, 1
      %p326 = por %p324, %p325
      %p327 = scmp.ne.s32.totalorder %s319, %s322
      %p328 = scmp.eq.s32.totalorder %s37, 0
      %p329 = por %p327, %p328
      %p330 = scmp.ne.s32.totalorder %s319, %s322
      %p331 = scmp.eq.s32.totalorder %s42, 1
      %p332 = por %p330, %p331
      %p333 = scmp.ne.s32.totalorder %s322, %s323
      %p334 = scmp.eq.s32.totalorder %s42, 0
      %p335 = por %p333, %p334
      %p336 = scmp.ne.s32.totalorder %s322, %s323
      %p337 = scmp.eq.s32.totalorder %s43, 1
      %p338 = por %p336, %p337
      %p340 = scmp.ne.s32.totalorder %s323, %s339
      %p341 = scmp.eq.s32.totalorder %s43, 0
      %p342 = por %p340, %p341
      %s343 = ssub.s32 %s37, %s44
      %p344 = scmp.eq.s32.totalorder %s343, 0
      %s346 = sadd.s32 %s345, 1
      %s347 = scalar_select %p344, %s345, %s346
      %p350 = pneg %p344
      %p351 = scmp.eq.s32.totalorder %s37, 1
      %p352 = por %p350, %p351
      %p353 = scmp.ne.s32.totalorder %s345, %s348
      %p354 = scmp.eq.s32.totalorder %s37, 0
      %p355 = por %p353, %p354
      %p356 = scmp.ne.s32.totalorder %s345, %s348
      %p357 = scmp.eq.s32.totalorder %s42, 1
      %p358 = por %p356, %p357
      %p359 = scmp.ne.s32.totalorder %s348, %s349
      %p360 = scmp.eq.s32.totalorder %s42, 0
      %p361 = por %p359, %p360
      %p362 = scmp.ne.s32.totalorder %s348, %s349
      %p363 = scmp.eq.s32.totalorder %s43, 1
      %p364 = por %p362, %p363
      %p366 = scmp.ne.s32.totalorder %s349, %s365
      %p367 = scmp.eq.s32.totalorder %s43, 0
      %p368 = por %p366, %p367
      %p369 = scmp.le.s32.totalorder 1, %s37
      %p370 = scmp.lt.s32.totalorder %s37, 3
      %p371 = pnand %p369, %p370
      %p372 = pneg %p371
      // Predicated region
      $region9: #{tpu_custom_call.1} parent=5 // pred_check
        _
      $region10: #{tpu_custom_call.1} parent=5 // pred_check_branch
        %374 = sbr.rel (%p371) target = $region12
      $region11: #{tpu_custom_call.1} parent=5 // pred_region
        %s375 = ssub.s32 %s37, 1
        // Predicated region
        $region13: #{tpu_custom_call.1} parent=11 // pred_check
          %p376 = pneg %p162
        $region14: #{tpu_custom_call.1} parent=11 // pred_check_branch
          %378 = sbr.rel (%p376) target = $region16
        $region15: #{tpu_custom_call.1} parent=11 // pred_region
          %s380 = ssub.s32 512, 512
          %381 = vsyncadd [#allocation9], %s380
          %s382 = sshll.u32 [#allocation10], 4
          %s383 = int_to_ptr.vmem [resolvable:$true] %s382
          %388 = dma.hbm_to_vmem [thread:$0]  %s4, 512, %s383, [#allocation9], 128, 128, 8
        $region16: #{tpu_custom_call.1} parent=11 // pred_fallthru
          _
        // Predicated region
        $region17: #{tpu_custom_call.1} parent=11 // pred_check
          %p389 = pneg %p183
        $region18: #{tpu_custom_call.1} parent=11 // pred_check_branch
          %391 = sbr.rel (%p389) target = $region20
        $region19: #{tpu_custom_call.1} parent=11 // pred_region
          _
        $region20: #{tpu_custom_call.1} parent=11 // pred_fallthru
          _
        // Predicated region
        $region21: #{tpu_custom_call.1} parent=11 // pred_check
          %p392 = pneg %p204
        $region22: #{tpu_custom_call.1} parent=11 // pred_check_branch
          %394 = sbr.rel (%p392) target = $region24
        $region23: #{tpu_custom_call.1} parent=11 // pred_region
          %s396 = ssub.s32 512, 512
          %397 = vsyncadd [#allocation12], %s396
          %s398 = sshll.u32 [#allocation11], 4
          %s399 = int_to_ptr.vmem [resolvable:$true] %s398
          %404 = dma.hbm_to_vmem [thread:$0]  %s6, 512, %s399, [#allocation12], 128, 128, 8
        $region24: #{tpu_custom_call.1} parent=11 // pred_fallthru
          _
        // Predicated region
        $region25: #{tpu_custom_call.1} parent=11 // pred_check
          %p405 = pneg %p225
        $region26: #{tpu_custom_call.1} parent=11 // pred_check_branch
          %407 = sbr.rel (%p405) target = $region28
        $region27: #{tpu_custom_call.1} parent=11 // pred_region
          _
        $region28: #{tpu_custom_call.1} parent=11 // pred_fallthru
          _
        // Predicated region
        $region29: #{tpu_custom_call.1} parent=11 // pred_check
          %p408 = pneg %p246
        $region30: #{tpu_custom_call.1} parent=11 // pred_check_branch
          %410 = sbr.rel (%p408) target = $region32
        $region31: #{tpu_custom_call.1} parent=11 // pred_region
          %s412 = ssub.s32 512, 512
          %413 = vsyncadd [#allocation12], %s412
          %s414 = sshll.u32 [#allocation13], 4
          %s415 = int_to_ptr.vmem [resolvable:$true] %s414
          %420 = dma.hbm_to_vmem [thread:$0]  %s8, 512, %s415, [#allocation12], 128, 128, 8
        $region32: #{tpu_custom_call.1} parent=11 // pred_fallthru
          _
        // Predicated region
        $region33: #{tpu_custom_call.1} parent=11 // pred_check
          %p421 = pneg %p267
        $region34: #{tpu_custom_call.1} parent=11 // pred_check_branch
          %423 = sbr.rel (%p421) target = $region36
        $region35: #{tpu_custom_call.1} parent=11 // pred_region
          _
        $region36: #{tpu_custom_call.1} parent=11 // pred_fallthru
          _
        // Predicated region
        $region37: #{tpu_custom_call.1} parent=11 // pred_check
          %p424 = pneg %p288
        $region38: #{tpu_custom_call.1} parent=11 // pred_check_branch
          %426 = sbr.rel (%p424) target = $region40
        $region39: #{tpu_custom_call.1} parent=11 // pred_region
          %s428 = ssub.s32 512, 512
          %429 = vsyncadd [#allocation15], %s428
          %s430 = sshll.u32 [#allocation14], 4
          %s431 = int_to_ptr.vmem [resolvable:$true] %s430
          %436 = dma.hbm_to_vmem [thread:$0]  %s10, 512, %s431, [#allocation15], 128, 128, 8
        $region40: #{tpu_custom_call.1} parent=11 // pred_fallthru
          _
        // Predicated region
        $region41: #{tpu_custom_call.1} parent=11 // pred_check
          %p437 = pneg %p309
        $region42: #{tpu_custom_call.1} parent=11 // pred_check_branch
          %439 = sbr.rel (%p437) target = $region44
        $region43: #{tpu_custom_call.1} parent=11 // pred_region
          _
        $region44: #{tpu_custom_call.1} parent=11 // pred_fallthru
          _
      $region12: #{tpu_custom_call.1} parent=5 // pred_fallthru
        _
      %p440 = scmp.lt.s32.totalorder %s37, 2
      // Predicated region
      $region45: #{tpu_custom_call.1} parent=5 // pred_check
        %p441 = pneg %p440
      $region46: #{tpu_custom_call.1} parent=5 // pred_check_branch
        %443 = sbr.rel (%p441) target = $region48
      $region47: #{tpu_custom_call.1} parent=5 // pred_region
        // Predicated region
        $region49: #{tpu_custom_call.1} parent=47 // pred_check
          %p444 = pneg %p57
        $region50: #{tpu_custom_call.1} parent=47 // pred_check_branch
          %446 = sbr.rel (%p444) target = $region52
        $region51: #{tpu_custom_call.1} parent=47 // pred_region
          %s447 = sand.u32 %s47, 1
          %s448 = scalar_lea.sflag [#allocation3], %s447
          %s449 = sand.u32 %s47, 1
          %s450 = smul.addr %s449, 8
          %s451 = scalar_lea.vmem [#allocation2], %s450
          %s453 = ssub.s32 128, 128
          %454 = vsyncadd %s448, %s453
          %s455 = smul.addr %s37, 128
          %s456 = scalar_lea.hbm %s0, %s455
          %s458 = sshll.u32 %s451, 4
          %s459 = int_to_ptr.vmem [resolvable:$true] %s458
          %461 = dma.hbm_to_vmem [thread:$0]  %s456, 128, %s459, %s448
        $region52: #{tpu_custom_call.1} parent=47 // pred_fallthru
          _
        // Predicated region
        $region53: #{tpu_custom_call.1} parent=47 // pred_check
          %p462 = pneg %p83
        $region54: #{tpu_custom_call.1} parent=47 // pred_check_branch
          %464 = sbr.rel (%p462) target = $region56
        $region55: #{tpu_custom_call.1} parent=47 // pred_region
          %s465 = sand.u32 %s37, 1
          %s466 = scalar_lea.sflag [#allocation6], %s465
          %s467 = sand.u32 %s73, 1
          %s468 = smul.addr %s467, 8
          %s469 = scalar_lea.vmem [#allocation5], %s468
          %s471 = ssub.s32 128, 128
          %472 = vsyncadd %s466, %s471
          %s473 = smul.addr %s37, 128
          %s474 = scalar_lea.hbm %s1, %s473
          %s476 = sshll.u32 %s469, 4
          %s477 = int_to_ptr.vmem [resolvable:$true] %s476
          %479 = dma.hbm_to_vmem [thread:$0]  %s474, 128, %s477, %s466
        $region56: #{tpu_custom_call.1} parent=47 // pred_fallthru
          _
        // Predicated region
        $region57: #{tpu_custom_call.1} parent=47 // pred_check
          %p480 = pneg %p109
        $region58: #{tpu_custom_call.1} parent=47 // pred_check_branch
          %482 = sbr.rel (%p480) target = $region60
        $region59: #{tpu_custom_call.1} parent=47 // pred_region
          %s483 = sand.u32 %s37, 1
          %s484 = scalar_lea.sflag [#allocation6], %s483
          %s485 = sand.u32 %s99, 1
          %s486 = smul.addr %s485, 8
          %s487 = scalar_lea.vmem [#allocation7], %s486
          %s489 = ssub.s32 128, 128
          %490 = vsyncadd %s484, %s489
          %s491 = smul.addr %s37, 128
          %s492 = scalar_lea.hbm %s2, %s491
          %s494 = sshll.u32 %s487, 4
          %s495 = int_to_ptr.vmem [resolvable:$true] %s494
          %497 = dma.hbm_to_vmem [thread:$0]  %s492, 128, %s495, %s484
        $region60: #{tpu_custom_call.1} parent=47 // pred_fallthru
          _
        // Predicated region
        $region61: #{tpu_custom_call.1} parent=47 // pred_check
          %p498 = pneg %p135
        $region62: #{tpu_custom_call.1} parent=47 // pred_check_branch
          %500 = sbr.rel (%p498) target = $region64
        $region63: #{tpu_custom_call.1} parent=47 // pred_region
          %s501 = sand.u32 %s37, 1
          %s502 = scalar_lea.sflag [#allocation9], %s501
          %s503 = sand.u32 %s125, 1
          %s504 = smul.addr %s503, 8
          %s505 = scalar_lea.vmem [#allocation8], %s504
          %s507 = ssub.s32 128, 128
          %508 = vsyncadd %s502, %s507
          %s509 = smul.addr %s37, 128
          %s510 = scalar_lea.hbm %s3, %s509
          %s512 = sshll.u32 %s505, 4
          %s513 = int_to_ptr.vmem [resolvable:$true] %s512
          %515 = dma.hbm_to_vmem [thread:$0]  %s510, 128, %s513, %s502
        $region64: #{tpu_custom_call.1} parent=47 // pred_fallthru
          _
      $region48: #{tpu_custom_call.1} parent=5 // pred_fallthru
        _
      %p516 = scmp.le.s32.totalorder 1, %s37
      %p517 = scmp.lt.s32.totalorder %s37, 3
      %p518 = pnand %p516, %p517
      %p519 = pneg %p518
      // Predicated region
      $region65: #{tpu_custom_call.1} parent=5 // pred_check
        _
      $region66: #{tpu_custom_call.1} parent=5 // pred_check_branch
        %521 = sbr.rel (%p518) target = $region68
      $region67: #{tpu_custom_call.1} parent=5 // pred_region
        %s522 = ssub.s32 %s37, 1
        %s523 = sand.u32 %s50, 1
        %s524 = scalar_lea.sflag [#allocation3], %s523
        %s525 = sand.u32 %s50, 1
        %s526 = smul.addr %s525, 8
        %s527 = scalar_lea.vmem [#allocation2], %s526
        // Predicated region
        $region69: #{tpu_custom_call.1} parent=67 // pred_check
          %p528 = pneg %p63
        $region70: #{tpu_custom_call.1} parent=67 // pred_check_branch
          %530 = sbr.rel (%p528) target = $region72
        $region71: #{tpu_custom_call.1} parent=67 // pred_region
          %531 = dma.done %s524, 128
        $region72: #{tpu_custom_call.1} parent=67 // pred_fallthru
          _
        %s532 = sand.u32 %s42, 1
        %s533 = scalar_lea.sflag [#allocation6], %s532
        %s534 = sand.u32 %s76, 1
        %s535 = smul.addr %s534, 8
        %s536 = scalar_lea.vmem [#allocation5], %s535
        // Predicated region
        $region73: #{tpu_custom_call.1} parent=67 // pred_check
          %p537 = pneg %p89
        $region74: #{tpu_custom_call.1} parent=67 // pred_check_branch
          %539 = sbr.rel (%p537) target = $region76
        $region75: #{tpu_custom_call.1} parent=67 // pred_region
          %540 = dma.done %s533, 128
        $region76: #{tpu_custom_call.1} parent=67 // pred_fallthru
          _
        %s541 = sand.u32 %s42, 1
        %s542 = scalar_lea.sflag [#allocation6], %s541
        %s543 = sand.u32 %s102, 1
        %s544 = smul.addr %s543, 8
        %s545 = scalar_lea.vmem [#allocation7], %s544
        // Predicated region
        $region77: #{tpu_custom_call.1} parent=67 // pred_check
          %p546 = pneg %p115
        $region78: #{tpu_custom_call.1} parent=67 // pred_check_branch
          %548 = sbr.rel (%p546) target = $region80
        $region79: #{tpu_custom_call.1} parent=67 // pred_region
          %549 = dma.done %s542, 128
        $region80: #{tpu_custom_call.1} parent=67 // pred_fallthru
          _
        %s550 = sand.u32 %s42, 1
        %s551 = scalar_lea.sflag [#allocation9], %s550
        %s552 = sand.u32 %s128, 1
        %s553 = smul.addr %s552, 8
        %s554 = scalar_lea.vmem [#allocation8], %s553
        // Predicated region
        $region81: #{tpu_custom_call.1} parent=67 // pred_check
          %p555 = pneg %p141
        $region82: #{tpu_custom_call.1} parent=67 // pred_check_branch
          %557 = sbr.rel (%p555) target = $region84
        $region83: #{tpu_custom_call.1} parent=67 // pred_region
          %558 = dma.done %s551, 128
        $region84: #{tpu_custom_call.1} parent=67 // pred_fallthru
          _
        // Predicated region
        $region85: #{tpu_custom_call.1} parent=67 // pred_check
          %p559 = pneg %p162
        $region86: #{tpu_custom_call.1} parent=67 // pred_check_branch
          %561 = sbr.rel (%p559) target = $region88
        $region87: #{tpu_custom_call.1} parent=67 // pred_region
          %562 = dma.done [#allocation9], 512
        $region88: #{tpu_custom_call.1} parent=67 // pred_fallthru
          _
        // Predicated region
        $region89: #{tpu_custom_call.1} parent=67 // pred_check
          %p563 = pneg %p204
        $region90: #{tpu_custom_call.1} parent=67 // pred_check_branch
          %565 = sbr.rel (%p563) target = $region92
        $region91: #{tpu_custom_call.1} parent=67 // pred_region
          %566 = dma.done [#allocation12], 512
        $region92: #{tpu_custom_call.1} parent=67 // pred_fallthru
          _
        // Predicated region
        $region93: #{tpu_custom_call.1} parent=67 // pred_check
          %p567 = pneg %p246
        $region94: #{tpu_custom_call.1} parent=67 // pred_check_branch
          %569 = sbr.rel (%p567) target = $region96
        $region95: #{tpu_custom_call.1} parent=67 // pred_region
          %570 = dma.done [#allocation12], 512
        $region96: #{tpu_custom_call.1} parent=67 // pred_fallthru
          _
        // Predicated region
        $region97: #{tpu_custom_call.1} parent=67 // pred_check
          %p571 = pneg %p288
        $region98: #{tpu_custom_call.1} parent=67 // pred_check_branch
          %573 = sbr.rel (%p571) target = $region100
        $region99: #{tpu_custom_call.1} parent=67 // pred_region
          %574 = dma.done [#allocation15], 512
        $region100: #{tpu_custom_call.1} parent=67 // pred_fallthru
          _
        %s575 = sand.u32 %s50, 1
        %s576 = scalar_lea.sflag [#allocation3], %s575
        %s577 = sand.u32 %s50, 1
        %s578 = smul.addr %s577, 8
        %s579 = scalar_lea.vmem [#allocation2], %s578
        %p580 = pneg %p63
        %p581 = pneg %p60
        %s582 = sand.u32 %s42, 1
        %s583 = scalar_lea.sflag [#allocation6], %s582
        %s584 = sand.u32 %s76, 1
        %s585 = smul.addr %s584, 8
        %s586 = scalar_lea.vmem [#allocation5], %s585
        %p587 = pneg %p89
        %p588 = pneg %p86
        %s589 = sand.u32 %s42, 1
        %s590 = scalar_lea.sflag [#allocation6], %s589
        %s591 = sand.u32 %s102, 1
        %s592 = smul.addr %s591, 8
        %s593 = scalar_lea.vmem [#allocation7], %s592
        %p594 = pneg %p115
        %p595 = pneg %p112
        %s596 = sand.u32 %s42, 1
        %s597 = scalar_lea.sflag [#allocation9], %s596
        %s598 = sand.u32 %s128, 1
        %s599 = smul.addr %s598, 8
        %s600 = scalar_lea.vmem [#allocation8], %s599
        %p601 = pneg %p141
        %p602 = pneg %p138
        %p603 = pneg %p162
        %p604 = pneg %p159
        %p605 = pneg %p183
        %p606 = pneg %p180
        %p607 = pneg %p204
        %p608 = pneg %p201
        %p609 = pneg %p225
        %p610 = pneg %p222
        %p611 = pneg %p246
        %p612 = pneg %p243
        %p613 = pneg %p267
        %p614 = pneg %p264
        %p615 = pneg %p288
        %p616 = pneg %p285
        %p617 = pneg %p309
        %p618 = pneg %p306
        %p619 = pneg %p335
        %p620 = pneg %p332
        %s621 = sand.u32 %s322, 1
        %s622 = scalar_lea.sflag [#allocation4], %s621
        %s623 = sand.u32 %s322, 1
        %s624 = smul.addr %s623, 8
        %s625 = scalar_lea.vmem [#allocation16], %s624
        %p626 = pneg %p361
        %p627 = pneg %p358
        %s628 = sand.u32 %s348, 1
        %s629 = scalar_lea.sflag [#allocation18], %s628
        %s630 = sand.u32 %s348, 1
        %s631 = smul.addr %s630, 8
        %s632 = scalar_lea.vmem [#allocation17], %s631
        %v633 = vld [vmem:[%s527] sm:$0xff]
        %v634 = vld [vmem:[%s536] sm:$0xff]
        %v635 = vld [vmem:[%s545] sm:$0xff]
        %v636 = vld [vmem:[%s554] sm:$0xff]
        %v637 = vld [vmem:[#allocation10] sm:$0xff]
        %v638 = vld [vmem:[#allocation10 + $0x8] sm:$0xff]
        %v639 = vld [vmem:[#allocation10 + $0x10] sm:$0xff]
        %v640 = vld [vmem:[#allocation10 + $0x18] sm:$0xff]
        %v641 = vld [vmem:[%s5] sm:$0x1]
        %v643 = vlaneseq
        %v644 = vshrl.u32 %v643, 7
        %v645 = vsub.s32 0, %v644
        %v646 = vrot.slane %v641, %v645
        %vm648 = vcmask 261120
        %v650 = vsel %vm648, %v633, 0
        %652 = vmatprep.subr.mxu0 0.0
        %653 = vmatpush1.msra.mxu0 0.0
        %654 = vmatprep.subr.mxu0 0.0
        %655 = vmatpush1.msra.mxu0 0.0
        %656 = vmatprep.subr.mxu0 0.0
        %657 = vmatpush1.msra.mxu0 0.0
        %658 = vmatprep.subr.mxu0 0.0
        %659 = vmatpush1.msra.mxu0 0.0
        %660 = vmatprep.subr.mxu0 0.0
        %661 = vmatpush1.msra.mxu0 0.0
        %662 = vmatprep.subr.mxu0 0.0
        %663 = vmatpush1.msra.mxu0 0.0
        %664 = vmatprep.subr.mxu0 0.0
        %665 = vmatpush1.msra.mxu0 0.0
        %666 = vmatprep.subr.mxu0 0.0
        %667 = vmatpush1.msra.mxu0 0.0
        %668 = vmatprep.subr.mxu0 0.0
        %669 = vmatpush1.msra.mxu0 0.0
        %670 = vmatprep.subr.mxu0 0.0
        %671 = vmatpush1.msra.mxu0 0.0
        %672 = vmatprep.subr.mxu0 0.0
        %673 = vmatpush1.msra.mxu0 0.0
        %674 = vmatprep.subr.mxu0 0.0
        %675 = vmatpush1.msra.mxu0 0.0
        %676 = vmatprep.subr.mxu0 0.0
        %677 = vmatpush1.msra.mxu0 %v640
        %678 = vmatprep.subr.mxu0 0.0
        %679 = vmatpush1.msra.mxu0 %v639
        %680 = vmatprep.subr.mxu0 0.0
        %681 = vmatpush1.msra.mxu0 %v638
        %682 = vmatprep.subr.mxu0 0.0
        %683 = vmatpush1.msra.mxu0 %v637
        %684 = vmatprep.subr.mxu0 0.0
        %685 = vmatpush2.msra.mxu0 0.0
        %686 = vmatprep.subr.mxu0 0.0
        %687 = vmatpush2.msra.mxu0 0.0
        %688 = vmatprep.subr.mxu0 0.0
        %689 = vmatpush2.msra.mxu0 0.0
        %690 = vmatprep.subr.mxu0 0.0
        %691 = vmatpush2.msra.mxu0 0.0
        %692 = vmatprep.subr.mxu0 0.0
        %693 = vmatpush2.msra.mxu0 0.0
        %694 = vmatprep.subr.mxu0 0.0
        %695 = vmatpush2.msra.mxu0 0.0
        %696 = vmatprep.subr.mxu0 0.0
        %697 = vmatpush2.msra.mxu0 0.0
        %698 = vmatprep.subr.mxu0 0.0
        %699 = vmatpush2.msra.mxu0 0.0
        %700 = vmatprep.subr.mxu0 0.0
        %701 = vmatpush2.msra.mxu0 0.0
        %702 = vmatprep.subr.mxu0 0.0
        %703 = vmatpush2.msra.mxu0 0.0
        %704 = vmatprep.subr.mxu0 0.0
        %705 = vmatpush2.msra.mxu0 0.0
        %706 = vmatprep.subr.mxu0 0.0
        %707 = vmatpush2.msra.mxu0 0.0
        %708 = vmatprep.subr.mxu0 0.0
        %709 = vmatpush2.msra.mxu0 0.0
        %710 = vmatprep.subr.mxu0 0.0
        %711 = vmatpush2.msra.mxu0 0.0
        %712 = vmatprep.subr.mxu0 0.0
        %713 = vmatpush2.msra.mxu0 0.0
        %714 = vmatprep.subr.mxu0 0.0
        %715 = vmatpush2.msra.mxu0 0.0
        %716 = vmatprep.mubr.f32.mxu0 0.0
        %717 = vmatmul.mubr.f32.gmra.mxu0 %v650
        %v718 = vpop.f32.mrf.mxu0
        %v719 = vadd.f32 %v646, %v718
        %v720 = vpop.f32.mrf.mxu0
        %721 = vdwg.mxu0
        %v722 = vld [vmem:[#allocation11] sm:$0xff]
        %v723 = vld [vmem:[#allocation11 + $0x8] sm:$0xff]
        %v724 = vld [vmem:[#allocation11 + $0x10] sm:$0xff]
        %v725 = vld [vmem:[#allocation11 + $0x18] sm:$0xff]
        %v726 = vld [vmem:[%s7] sm:$0x1]
        %v728 = vlaneseq
        %v729 = vshrl.u32 %v728, 7
        %v730 = vsub.s32 0, %v729
        %v731 = vrot.slane %v726, %v730
        %v734 = vsel %vm648, %v634, 0
        %736 = vmatprep.subr.mxu0 0.0
        %737 = vmatpush1.msra.mxu0 0.0
        %738 = vmatprep.subr.mxu0 0.0
        %739 = vmatpush1.msra.mxu0 0.0
        %740 = vmatprep.subr.mxu0 0.0
        %741 = vmatpush1.msra.mxu0 0.0
        %742 = vmatprep.subr.mxu0 0.0
        %743 = vmatpush1.msra.mxu0 0.0
        %744 = vmatprep.subr.mxu0 0.0
        %745 = vmatpush1.msra.mxu0 0.0
        %746 = vmatprep.subr.mxu0 0.0
        %747 = vmatpush1.msra.mxu0 0.0
        %748 = vmatprep.subr.mxu0 0.0
        %749 = vmatpush1.msra.mxu0 0.0
        %750 = vmatprep.subr.mxu0 0.0
        %751 = vmatpush1.msra.mxu0 0.0
        %752 = vmatprep.subr.mxu0 0.0
        %753 = vmatpush1.msra.mxu0 0.0
        %754 = vmatprep.subr.mxu0 0.0
        %755 = vmatpush1.msra.mxu0 0.0
        %756 = vmatprep.subr.mxu0 0.0
        %757 = vmatpush1.msra.mxu0 0.0
        %758 = vmatprep.subr.mxu0 0.0
        %759 = vmatpush1.msra.mxu0 0.0
        %760 = vmatprep.subr.mxu0 0.0
        %761 = vmatpush1.msra.mxu0 %v725
        %762 = vmatprep.subr.mxu0 0.0
        %763 = vmatpush1.msra.mxu0 %v724
        %764 = vmatprep.subr.mxu0 0.0
        %765 = vmatpush1.msra.mxu0 %v723
        %766 = vmatprep.subr.mxu0 0.0
        %767 = vmatpush1.msra.mxu0 %v722
        %768 = vmatprep.subr.mxu0 0.0
        %769 = vmatpush2.msra.mxu0 0.0
        %770 = vmatprep.subr.mxu0 0.0
        %771 = vmatpush2.msra.mxu0 0.0
        %772 = vmatprep.subr.mxu0 0.0
        %773 = vmatpush2.msra.mxu0 0.0
        %774 = vmatprep.subr.mxu0 0.0
        %775 = vmatpush2.msra.mxu0 0.0
        %776 = vmatprep.subr.mxu0 0.0
        %777 = vmatpush2.msra.mxu0 0.0
        %778 = vmatprep.subr.mxu0 0.0
        %779 = vmatpush2.msra.mxu0 0.0
        %780 = vmatprep.subr.mxu0 0.0
        %781 = vmatpush2.msra.mxu0 0.0
        %782 = vmatprep.subr.mxu0 0.0
        %783 = vmatpush2.msra.mxu0 0.0
        %784 = vmatprep.subr.mxu0 0.0
        %785 = vmatpush2.msra.mxu0 0.0
        %786 = vmatprep.subr.mxu0 0.0
        %787 = vmatpush2.msra.mxu0 0.0
        %788 = vmatprep.subr.mxu0 0.0
        %789 = vmatpush2.msra.mxu0 0.0
        %790 = vmatprep.subr.mxu0 0.0
        %791 = vmatpush2.msra.mxu0 0.0
        %792 = vmatprep.subr.mxu0 0.0
        %793 = vmatpush2.msra.mxu0 0.0
        %794 = vmatprep.subr.mxu0 0.0
        %795 = vmatpush2.msra.mxu0 0.0
        %796 = vmatprep.subr.mxu0 0.0
        %797 = vmatpush2.msra.mxu0 0.0
        %798 = vmatprep.subr.mxu0 0.0
        %799 = vmatpush2.msra.mxu0 0.0
        %800 = vmatprep.mubr.f32.mxu0 0.0
        %801 = vmatmul.mubr.f32.gmra.mxu0 %v734
        %v802 = vpop.f32.mrf.mxu0
        %v803 = vadd.f32 %v731, %v802
        %v804 = vpop.f32.mrf.mxu0
        %805 = vdwg.mxu0
        %v806 = vld [vmem:[#allocation13] sm:$0xff]
        %v807 = vld [vmem:[#allocation13 + $0x8] sm:$0xff]
        %v808 = vld [vmem:[#allocation13 + $0x10] sm:$0xff]
        %v809 = vld [vmem:[#allocation13 + $0x18] sm:$0xff]
        %v810 = vld [vmem:[%s9] sm:$0x1]
        %v812 = vlaneseq
        %v813 = vshrl.u32 %v812, 7
        %v814 = vsub.s32 0, %v813
        %v815 = vrot.slane %v810, %v814
        %v818 = vsel %vm648, %v635, 0
        %820 = vmatprep.subr.mxu0 0.0
        %821 = vmatpush1.msra.mxu0 0.0
        %822 = vmatprep.subr.mxu0 0.0
        %823 = vmatpush1.msra.mxu0 0.0
        %824 = vmatprep.subr.mxu0 0.0
        %825 = vmatpush1.msra.mxu0 0.0
        %826 = vmatprep.subr.mxu0 0.0
        %827 = vmatpush1.msra.mxu0 0.0
        %828 = vmatprep.subr.mxu0 0.0
        %829 = vmatpush1.msra.mxu0 0.0
        %830 = vmatprep.subr.mxu0 0.0
        %831 = vmatpush1.msra.mxu0 0.0
        %832 = vmatprep.subr.mxu0 0.0
        %833 = vmatpush1.msra.mxu0 0.0
        %834 = vmatprep.subr.mxu0 0.0
        %835 = vmatpush1.msra.mxu0 0.0
        %836 = vmatprep.subr.mxu0 0.0
        %837 = vmatpush1.msra.mxu0 0.0
        %838 = vmatprep.subr.mxu0 0.0
        %839 = vmatpush1.msra.mxu0 0.0
        %840 = vmatprep.subr.mxu0 0.0
        %841 = vmatpush1.msra.mxu0 0.0
        %842 = vmatprep.subr.mxu0 0.0
        %843 = vmatpush1.msra.mxu0 0.0
        %844 = vmatprep.subr.mxu0 0.0
        %845 = vmatpush1.msra.mxu0 %v809
        %846 = vmatprep.subr.mxu0 0.0
        %847 = vmatpush1.msra.mxu0 %v808
        %848 = vmatprep.subr.mxu0 0.0
        %849 = vmatpush1.msra.mxu0 %v807
        %850 = vmatprep.subr.mxu0 0.0
        %851 = vmatpush1.msra.mxu0 %v806
        %852 = vmatprep.subr.mxu0 0.0
        %853 = vmatpush2.msra.mxu0 0.0
        %854 = vmatprep.subr.mxu0 0.0
        %855 = vmatpush2.msra.mxu0 0.0
        %856 = vmatprep.subr.mxu0 0.0
        %857 = vmatpush2.msra.mxu0 0.0
        %858 = vmatprep.subr.mxu0 0.0
        %859 = vmatpush2.msra.mxu0 0.0
        %860 = vmatprep.subr.mxu0 0.0
        %861 = vmatpush2.msra.mxu0 0.0
        %862 = vmatprep.subr.mxu0 0.0
        %863 = vmatpush2.msra.mxu0 0.0
        %864 = vmatprep.subr.mxu0 0.0
        %865 = vmatpush2.msra.mxu0 0.0
        %866 = vmatprep.subr.mxu0 0.0
        %867 = vmatpush2.msra.mxu0 0.0
        %868 = vmatprep.subr.mxu0 0.0
        %869 = vmatpush2.msra.mxu0 0.0
        %870 = vmatprep.subr.mxu0 0.0
        %871 = vmatpush2.msra.mxu0 0.0
        %872 = vmatprep.subr.mxu0 0.0
        %873 = vmatpush2.msra.mxu0 0.0
        %874 = vmatprep.subr.mxu0 0.0
        %875 = vmatpush2.msra.mxu0 0.0
        %876 = vmatprep.subr.mxu0 0.0
        %877 = vmatpush2.msra.mxu0 0.0
        %878 = vmatprep.subr.mxu0 0.0
        %879 = vmatpush2.msra.mxu0 0.0
        %880 = vmatprep.subr.mxu0 0.0
        %881 = vmatpush2.msra.mxu0 0.0
        %882 = vmatprep.subr.mxu0 0.0
        %883 = vmatpush2.msra.mxu0 0.0
        %884 = vmatprep.mubr.f32.mxu0 0.0
        %885 = vmatmul.mubr.f32.gmra.mxu0 %v818
        %v886 = vpop.f32.mrf.mxu0
        %v887 = vadd.f32 %v815, %v886
        %v888 = vpop.f32.mrf.mxu0
        %889 = vdwg.mxu0
        %v890 = vmul.f32 %v719, 0.35355338
        %vm891 = vcmp.eq.f32.partialorder %v636, 0.0
        %vm892 = vcmask 64512
        %v894 = vsel %vm892, %v890, 0
        %v897 = vsel %vm892, %v803, 0
        %899 = vmatprep.subr.mxu0 0.0
        %900 = vmatpush1.xpose.msra.mxu0 0.0
        %901 = vmatprep.subr.mxu0 0.0
        %902 = vmatpush1.xpose.msra.mxu0 0.0
        %903 = vmatprep.subr.mxu0 0.0
        %904 = vmatpush1.xpose.msra.mxu0 0.0
        %905 = vmatprep.subr.mxu0 0.0
        %906 = vmatpush1.xpose.msra.mxu0 0.0
        %907 = vmatprep.subr.mxu0 0.0
        %908 = vmatpush1.xpose.msra.mxu0 0.0
        %909 = vmatprep.subr.mxu0 0.0
        %910 = vmatpush1.xpose.msra.mxu0 0.0
        %911 = vmatprep.subr.mxu0 0.0
        %912 = vmatpush1.xpose.msra.mxu0 0.0
        %913 = vmatprep.subr.mxu0 0.0
        %914 = vmatpush1.xpose.msra.mxu0 0.0
        %915 = vmatprep.subr.mxu0 0.0
        %916 = vmatpush1.xpose.msra.mxu0 0.0
        %917 = vmatprep.subr.mxu0 0.0
        %918 = vmatpush1.xpose.msra.mxu0 0.0
        %919 = vmatprep.subr.mxu0 0.0
        %920 = vmatpush1.xpose.msra.mxu0 0.0
        %921 = vmatprep.subr.mxu0 0.0
        %922 = vmatpush1.xpose.msra.mxu0 0.0
        %923 = vmatprep.subr.mxu0 0.0
        %924 = vmatpush1.xpose.msra.mxu0 0.0
        %925 = vmatprep.subr.mxu0 0.0
        %926 = vmatpush1.xpose.msra.mxu0 0.0
        %927 = vmatprep.subr.mxu0 0.0
        %928 = vmatpush1.xpose.msra.mxu0 0.0
        %929 = vmatprep.subr.mxu0 0.0
        %930 = vmatpush1.xpose.msra.mxu0 %v897
        %931 = vmatprep.subr.mxu0 0.0
        %932 = vmatpush2.xpose.msra.mxu0 0.0
        %933 = vmatprep.subr.mxu0 0.0
        %934 = vmatpush2.xpose.msra.mxu0 0.0
        %935 = vmatprep.subr.mxu0 0.0
        %936 = vmatpush2.xpose.msra.mxu0 0.0
        %937 = vmatprep.subr.mxu0 0.0
        %938 = vmatpush2.xpose.msra.mxu0 0.0
        %939 = vmatprep.subr.mxu0 0.0
        %940 = vmatpush2.xpose.msra.mxu0 0.0
        %941 = vmatprep.subr.mxu0 0.0
        %942 = vmatpush2.xpose.msra.mxu0 0.0
        %943 = vmatprep.subr.mxu0 0.0
        %944 = vmatpush2.xpose.msra.mxu0 0.0
        %945 = vmatprep.subr.mxu0 0.0
        %946 = vmatpush2.xpose.msra.mxu0 0.0
        %947 = vmatprep.subr.mxu0 0.0
        %948 = vmatpush2.xpose.msra.mxu0 0.0
        %949 = vmatprep.subr.mxu0 0.0
        %950 = vmatpush2.xpose.msra.mxu0 0.0
        %951 = vmatprep.subr.mxu0 0.0
        %952 = vmatpush2.xpose.msra.mxu0 0.0
        %953 = vmatprep.subr.mxu0 0.0
        %954 = vmatpush2.xpose.msra.mxu0 0.0
        %955 = vmatprep.subr.mxu0 0.0
        %956 = vmatpush2.xpose.msra.mxu0 0.0
        %957 = vmatprep.subr.mxu0 0.0
        %958 = vmatpush2.xpose.msra.mxu0 0.0
        %959 = vmatprep.subr.mxu0 0.0
        %960 = vmatpush2.xpose.msra.mxu0 0.0
        %961 = vmatprep.subr.mxu0 0.0
        %962 = vmatpush2.xpose.msra.mxu0 0.0
        %963 = vmatprep.mubr.f32.mxu0 0.0
        %964 = vmatmul.mubr.f32.gmra.mxu0 %v894
        %v965 = vpop.f32.mrf.mxu0
        %v966 = vadd.f32 0.0, %v965
        %v967 = vpop.f32.mrf.mxu0
        %968 = vdwg.mxu0
        %v969 = vsel %vm891, -1e+09, %v966
        %v970 = vsel %vm892, %v969, -inf
        %971 = vmax.xlane.f32.xlu0 %v970
        %v972 = vpop.xlane.xlu0 %971
        %v973 = vsub.f32 %v969, %v972
        %v974 = vmul.f32 %v973, 1.442695
        %v975 = vpow.pop %v974
        %v976 = vsel %vm892, %v975, 0.0
        %977 = vadd.xlane.f32.xlu0 %v976
        %v978 = vpop.xlane.xlu0 %977
        %v979 = vrcp.pop %v978
        %v980 = vmul.f32 %v975, %v979
        %v981 = vadd.f32 %v980, 0.0
        %v983 = vsel %vm892, %v980, 0
        %985 = vmatprep.subr.mxu0 0.0
        %986 = vmatpush1.msra.mxu0 0.0
        %987 = vmatprep.subr.mxu0 0.0
        %988 = vmatpush1.msra.mxu0 0.0
        %989 = vmatprep.subr.mxu0 0.0
        %990 = vmatpush1.msra.mxu0 0.0
        %991 = vmatprep.subr.mxu0 0.0
        %992 = vmatpush1.msra.mxu0 0.0
        %993 = vmatprep.subr.mxu0 0.0
        %994 = vmatpush1.msra.mxu0 0.0
        %995 = vmatprep.subr.mxu0 0.0
        %996 = vmatpush1.msra.mxu0 0.0
        %997 = vmatprep.subr.mxu0 0.0
        %998 = vmatpush1.msra.mxu0 0.0
        %999 = vmatprep.subr.mxu0 0.0
        %1000 = vmatpush1.msra.mxu0 0.0
        %1001 = vmatprep.subr.mxu0 0.0
        %1002 = vmatpush1.msra.mxu0 0.0
        %1003 = vmatprep.subr.mxu0 0.0
        %1004 = vmatpush1.msra.mxu0 0.0
        %1005 = vmatprep.subr.mxu0 0.0
        %1006 = vmatpush1.msra.mxu0 0.0
        %1007 = vmatprep.subr.mxu0 0.0
        %1008 = vmatpush1.msra.mxu0 0.0
        %1009 = vmatprep.subr.mxu0 0.0
        %1010 = vmatpush1.msra.mxu0 0.0
        %1011 = vmatprep.subr.mxu0 0.0
        %1012 = vmatpush1.msra.mxu0 0.0
        %1013 = vmatprep.subr.mxu0 0.0
        %1014 = vmatpush1.msra.mxu0 0.0
        %1015 = vmatprep.subr.mxu0 0.0
        %1016 = vmatpush1.msra.mxu0 %v887
        %1017 = vmatprep.subr.mxu0 0.0
        %1018 = vmatpush2.msra.mxu0 0.0
        %1019 = vmatprep.subr.mxu0 0.0
        %1020 = vmatpush2.msra.mxu0 0.0
        %1021 = vmatprep.subr.mxu0 0.0
        %1022 = vmatpush2.msra.mxu0 0.0
        %1023 = vmatprep.subr.mxu0 0.0
        %1024 = vmatpush2.msra.mxu0 0.0
        %1025 = vmatprep.subr.mxu0 0.0
        %1026 = vmatpush2.msra.mxu0 0.0
        %1027 = vmatprep.subr.mxu0 0.0
        %1028 = vmatpush2.msra.mxu0 0.0
        %1029 = vmatprep.subr.mxu0 0.0
        %1030 = vmatpush2.msra.mxu0 0.0
        %1031 = vmatprep.subr.mxu0 0.0
        %1032 = vmatpush2.msra.mxu0 0.0
        %1033 = vmatprep.subr.mxu0 0.0
        %1034 = vmatpush2.msra.mxu0 0.0
        %1035 = vmatprep.subr.mxu0 0.0
        %1036 = vmatpush2.msra.mxu0 0.0
        %1037 = vmatprep.subr.mxu0 0.0
        %1038 = vmatpush2.msra.mxu0 0.0
        %1039 = vmatprep.subr.mxu0 0.0
        %1040 = vmatpush2.msra.mxu0 0.0
        %1041 = vmatprep.subr.mxu0 0.0
        %1042 = vmatpush2.msra.mxu0 0.0
        %1043 = vmatprep.subr.mxu0 0.0
        %1044 = vmatpush2.msra.mxu0 0.0
        %1045 = vmatprep.subr.mxu0 0.0
        %1046 = vmatpush2.msra.mxu0 0.0
        %1047 = vmatprep.subr.mxu0 0.0
        %1048 = vmatpush2.msra.mxu0 0.0
        %1049 = vmatprep.mubr.f32.mxu0 0.0
        %1050 = vmatmul.mubr.f32.gmra.mxu0 %v983
        %v1051 = vpop.f32.mrf.mxu0
        %v1052 = vadd.f32 0.0, %v1051
        %v1053 = vpop.f32.mrf.mxu0
        %1054 = vdwg.mxu0
        %v1055 = vld [vmem:[#allocation14] sm:$0xff]
        %1056 = vrot.lane.b32.xlu0 %v890, 120
        %v1057 = vpop.permute.xlu0 %1056
        %1058 = vrot.lane.b32.xlu0 %v803, 120
        %v1059 = vpop.permute.xlu0 %1058
        %v1060 = vsel %vm892, %v1057, 0
        %v1062 = vsel %vm892, %v1059, 0
        %1064 = vmatprep.subr.mxu0 0.0
        %1065 = vmatpush1.xpose.msra.mxu0 0.0
        %1066 = vmatprep.subr.mxu0 0.0
        %1067 = vmatpush1.xpose.msra.mxu0 0.0
        %1068 = vmatprep.subr.mxu0 0.0
        %1069 = vmatpush1.xpose.msra.mxu0 0.0
        %1070 = vmatprep.subr.mxu0 0.0
        %1071 = vmatpush1.xpose.msra.mxu0 0.0
        %1072 = vmatprep.subr.mxu0 0.0
        %1073 = vmatpush1.xpose.msra.mxu0 0.0
        %1074 = vmatprep.subr.mxu0 0.0
        %1075 = vmatpush1.xpose.msra.mxu0 0.0
        %1076 = vmatprep.subr.mxu0 0.0
        %1077 = vmatpush1.xpose.msra.mxu0 0.0
        %1078 = vmatprep.subr.mxu0 0.0
        %1079 = vmatpush1.xpose.msra.mxu0 0.0
        %1080 = vmatprep.subr.mxu0 0.0
        %1081 = vmatpush1.xpose.msra.mxu0 0.0
        %1082 = vmatprep.subr.mxu0 0.0
        %1083 = vmatpush1.xpose.msra.mxu0 0.0
        %1084 = vmatprep.subr.mxu0 0.0
        %1085 = vmatpush1.xpose.msra.mxu0 0.0
        %1086 = vmatprep.subr.mxu0 0.0
        %1087 = vmatpush1.xpose.msra.mxu0 0.0
        %1088 = vmatprep.subr.mxu0 0.0
        %1089 = vmatpush1.xpose.msra.mxu0 0.0
        %1090 = vmatprep.subr.mxu0 0.0
        %1091 = vmatpush1.xpose.msra.mxu0 0.0
        %1092 = vmatprep.subr.mxu0 0.0
        %1093 = vmatpush1.xpose.msra.mxu0 0.0
        %1094 = vmatprep.subr.mxu0 0.0
        %1095 = vmatpush1.xpose.msra.mxu0 %v1062
        %1096 = vmatprep.subr.mxu0 0.0
        %1097 = vmatpush2.xpose.msra.mxu0 0.0
        %1098 = vmatprep.subr.mxu0 0.0
        %1099 = vmatpush2.xpose.msra.mxu0 0.0
        %1100 = vmatprep.subr.mxu0 0.0
        %1101 = vmatpush2.xpose.msra.mxu0 0.0
        %1102 = vmatprep.subr.mxu0 0.0
        %1103 = vmatpush2.xpose.msra.mxu0 0.0
        %1104 = vmatprep.subr.mxu0 0.0
        %1105 = vmatpush2.xpose.msra.mxu0 0.0
        %1106 = vmatprep.subr.mxu0 0.0
        %1107 = vmatpush2.xpose.msra.mxu0 0.0
        %1108 = vmatprep.subr.mxu0 0.0
        %1109 = vmatpush2.xpose.msra.mxu0 0.0
        %1110 = vmatprep.subr.mxu0 0.0
        %1111 = vmatpush2.xpose.msra.mxu0 0.0
        %1112 = vmatprep.subr.mxu0 0.0
        %1113 = vmatpush2.xpose.msra.mxu0 0.0
        %1114 = vmatprep.subr.mxu0 0.0
        %1115 = vmatpush2.xpose.msra.mxu0 0.0
        %1116 = vmatprep.subr.mxu0 0.0
        %1117 = vmatpush2.xpose.msra.mxu0 0.0
        %1118 = vmatprep.subr.mxu0 0.0
        %1119 = vmatpush2.xpose.msra.mxu0 0.0
        %1120 = vmatprep.subr.mxu0 0.0
        %1121 = vmatpush2.xpose.msra.mxu0 0.0
        %1122 = vmatprep.subr.mxu0 0.0
        %1123 = vmatpush2.xpose.msra.mxu0 0.0
        %1124 = vmatprep.subr.mxu0 0.0
        %1125 = vmatpush2.xpose.msra.mxu0 0.0
        %1126 = vmatprep.subr.mxu0 0.0
        %1127 = vmatpush2.xpose.msra.mxu0 0.0
        %1128 = vmatprep.mubr.f32.mxu0 0.0
        %1129 = vmatmul.mubr.f32.gmra.mxu0 %v1060
        %v1130 = vpop.f32.mrf.mxu0
        %v1131 = vadd.f32 0.0, %v1130
        %v1132 = vpop.f32.mrf.mxu0
        %1133 = vdwg.mxu0
        %v1134 = vsel %vm891, -1e+09, %v1131
        %v1135 = vsel %vm892, %v1134, -inf
        %1136 = vmax.xlane.f32.xlu0 %v1135
        %v1137 = vpop.xlane.xlu0 %1136
        %v1138 = vsub.f32 %v1134, %v1137
        %v1139 = vmul.f32 %v1138, 1.442695
        %v1140 = vpow.pop %v1139
        %v1141 = vsel %vm892, %v1140, 0.0
        %1142 = vadd.xlane.f32.xlu0 %v1141
        %v1143 = vpop.xlane.xlu0 %1142
        %v1144 = vrcp.pop %v1143
        %v1145 = vmul.f32 %v1140, %v1144
        %v1146 = vadd.f32 %v981, %v1145
        %1148 = vrot.lane.b32.xlu0 %v887, 120
        %v1149 = vpop.permute.xlu0 %1148
        %v1152 = vsel %vm892, %v1145, 0
        %1154 = vmatprep.subr.mxu0 0.0
        %1155 = vmatpush1.msra.mxu0 0.0
        %1156 = vmatprep.subr.mxu0 0.0
        %1157 = vmatpush1.msra.mxu0 0.0
        %1158 = vmatprep.subr.mxu0 0.0
        %1159 = vmatpush1.msra.mxu0 0.0
        %1160 = vmatprep.subr.mxu0 0.0
        %1161 = vmatpush1.msra.mxu0 0.0
        %1162 = vmatprep.subr.mxu0 0.0
        %1163 = vmatpush1.msra.mxu0 0.0
        %1164 = vmatprep.subr.mxu0 0.0
        %1165 = vmatpush1.msra.mxu0 0.0
        %1166 = vmatprep.subr.mxu0 0.0
        %1167 = vmatpush1.msra.mxu0 0.0
        %1168 = vmatprep.subr.mxu0 0.0
        %1169 = vmatpush1.msra.mxu0 0.0
        %1170 = vmatprep.subr.mxu0 0.0
        %1171 = vmatpush1.msra.mxu0 0.0
        %1172 = vmatprep.subr.mxu0 0.0
        %1173 = vmatpush1.msra.mxu0 0.0
        %1174 = vmatprep.subr.mxu0 0.0
        %1175 = vmatpush1.msra.mxu0 0.0
        %1176 = vmatprep.subr.mxu0 0.0
        %1177 = vmatpush1.msra.mxu0 0.0
        %1178 = vmatprep.subr.mxu0 0.0
        %1179 = vmatpush1.msra.mxu0 0.0
        %1180 = vmatprep.subr.mxu0 0.0
        %1181 = vmatpush1.msra.mxu0 0.0
        %1182 = vmatprep.subr.mxu0 0.0
        %1183 = vmatpush1.msra.mxu0 0.0
        %1184 = vmatprep.subr.mxu0 0.0
        %1185 = vmatpush1.msra.mxu0 %v1149
        %1186 = vmatprep.subr.mxu0 0.0
        %1187 = vmatpush2.msra.mxu0 0.0
        %1188 = vmatprep.subr.mxu0 0.0
        %1189 = vmatpush2.msra.mxu0 0.0
        %1190 = vmatprep.subr.mxu0 0.0
        %1191 = vmatpush2.msra.mxu0 0.0
        %1192 = vmatprep.subr.mxu0 0.0
        %1193 = vmatpush2.msra.mxu0 0.0
        %1194 = vmatprep.subr.mxu0 0.0
        %1195 = vmatpush2.msra.mxu0 0.0
        %1196 = vmatprep.subr.mxu0 0.0
        %1197 = vmatpush2.msra.mxu0 0.0
        %1198 = vmatprep.subr.mxu0 0.0
        %1199 = vmatpush2.msra.mxu0 0.0
        %1200 = vmatprep.subr.mxu0 0.0
        %1201 = vmatpush2.msra.mxu0 0.0
        %1202 = vmatprep.subr.mxu0 0.0
        %1203 = vmatpush2.msra.mxu0 0.0
        %1204 = vmatprep.subr.mxu0 0.0
        %1205 = vmatpush2.msra.mxu0 0.0
        %1206 = vmatprep.subr.mxu0 0.0
        %1207 = vmatpush2.msra.mxu0 0.0
        %1208 = vmatprep.subr.mxu0 0.0
        %1209 = vmatpush2.msra.mxu0 0.0
        %1210 = vmatprep.subr.mxu0 0.0
        %1211 = vmatpush2.msra.mxu0 0.0
        %1212 = vmatprep.subr.mxu0 0.0
        %1213 = vmatpush2.msra.mxu0 0.0
        %1214 = vmatprep.subr.mxu0 0.0
        %1215 = vmatpush2.msra.mxu0 0.0
        %1216 = vmatprep.subr.mxu0 0.0
        %1217 = vmatpush2.msra.mxu0 0.0
        %1218 = vmatprep.mubr.f32.mxu0 0.0
        %1219 = vmatmul.mubr.f32.gmra.mxu0 %v1152
        %v1220 = vpop.f32.mrf.mxu0
        %v1221 = vadd.f32 0.0, %v1220
        %v1222 = vpop.f32.mrf.mxu0
        %1223 = vdwg.mxu0
        %s1224 = scalar_lea.vmem [#allocation14], 8
        %v1225 = vld [vmem:[%s1224] sm:$0xff]
        %v1227 = vsel %vm892, %v1221, 0
        %1229 = vmatprep.subr.mxu0 0.0
        %1230 = vmatpush1.msra.mxu0 0.0
        %1231 = vmatprep.subr.mxu0 0.0
        %1232 = vmatpush1.msra.mxu0 0.0
        %1233 = vmatprep.subr.mxu0 0.0
        %1234 = vmatpush1.msra.mxu0 0.0
        %1235 = vmatprep.subr.mxu0 0.0
        %1236 = vmatpush1.msra.mxu0 0.0
        %1237 = vmatprep.subr.mxu0 0.0
        %1238 = vmatpush1.msra.mxu0 0.0
        %1239 = vmatprep.subr.mxu0 0.0
        %1240 = vmatpush1.msra.mxu0 0.0
        %1241 = vmatprep.subr.mxu0 0.0
        %1242 = vmatpush1.msra.mxu0 0.0
        %1243 = vmatprep.subr.mxu0 0.0
        %1244 = vmatpush1.msra.mxu0 0.0
        %1245 = vmatprep.subr.mxu0 0.0
        %1246 = vmatpush1.msra.mxu0 0.0
        %1247 = vmatprep.subr.mxu0 0.0
        %1248 = vmatpush1.msra.mxu0 0.0
        %1249 = vmatprep.subr.mxu0 0.0
        %1250 = vmatpush1.msra.mxu0 0.0
        %1251 = vmatprep.subr.mxu0 0.0
        %1252 = vmatpush1.msra.mxu0 0.0
        %1253 = vmatprep.subr.mxu0 0.0
        %1254 = vmatpush1.msra.mxu0 0.0
        %1255 = vmatprep.subr.mxu0 0.0
        %1256 = vmatpush1.msra.mxu0 0.0
        %1257 = vmatprep.subr.mxu0 0.0
        %1258 = vmatpush1.msra.mxu0 0.0
        %1259 = vmatprep.subr.mxu0 0.0
        %1260 = vmatpush1.msra.mxu0 %v1225
        %1261 = vmatprep.subr.mxu0 0.0
        %1262 = vmatpush2.msra.mxu0 0.0
        %1263 = vmatprep.subr.mxu0 0.0
        %1264 = vmatpush2.msra.mxu0 0.0
        %1265 = vmatprep.subr.mxu0 0.0
        %1266 = vmatpush2.msra.mxu0 0.0
        %1267 = vmatprep.subr.mxu0 0.0
        %1268 = vmatpush2.msra.mxu0 0.0
        %1269 = vmatprep.subr.mxu0 0.0
        %1270 = vmatpush2.msra.mxu0 0.0
        %1271 = vmatprep.subr.mxu0 0.0
        %1272 = vmatpush2.msra.mxu0 0.0
        %1273 = vmatprep.subr.mxu0 0.0
        %1274 = vmatpush2.msra.mxu0 0.0
        %1275 = vmatprep.subr.mxu0 0.0
        %1276 = vmatpush2.msra.mxu0 0.0
        %1277 = vmatprep.subr.mxu0 0.0
        %1278 = vmatpush2.msra.mxu0 0.0
        %1279 = vmatprep.subr.mxu0 0.0
        %1280 = vmatpush2.msra.mxu0 0.0
        %1281 = vmatprep.subr.mxu0 0.0
        %1282 = vmatpush2.msra.mxu0 0.0
        %1283 = vmatprep.subr.mxu0 0.0
        %1284 = vmatpush2.msra.mxu0 0.0
        %1285 = vmatprep.subr.mxu0 0.0
        %1286 = vmatpush2.msra.mxu0 0.0
        %1287 = vmatprep.subr.mxu0 0.0
        %1288 = vmatpush2.msra.mxu0 0.0
        %1289 = vmatprep.subr.mxu0 0.0
        %1290 = vmatpush2.msra.mxu0 0.0
        %1291 = vmatprep.subr.mxu0 0.0
        %1292 = vmatpush2.msra.mxu0 0.0
        %1293 = vmatprep.mubr.f32.mxu0 0.0
        %1294 = vmatmul.mubr.f32.gmra.mxu0 %v1227
        %v1295 = vpop.f32.mrf.mxu0
        %v1296 = vadd.f32 0.0, %v1295
        %v1297 = vpop.f32.mrf.mxu0
        %1298 = vdwg.mxu0
        %v1300 = vsel %vm892, %v1052, 0
        %1302 = vmatprep.subr.mxu0 0.0
        %1303 = vmatpush1.msra.mxu0 0.0
        %1304 = vmatprep.subr.mxu0 0.0
        %1305 = vmatpush1.msra.mxu0 0.0
        %1306 = vmatprep.subr.mxu0 0.0
        %1307 = vmatpush1.msra.mxu0 0.0
        %1308 = vmatprep.subr.mxu0 0.0
        %1309 = vmatpush1.msra.mxu0 0.0
        %1310 = vmatprep.subr.mxu0 0.0
        %1311 = vmatpush1.msra.mxu0 0.0
        %1312 = vmatprep.subr.mxu0 0.0
        %1313 = vmatpush1.msra.mxu0 0.0
        %1314 = vmatprep.subr.mxu0 0.0
        %1315 = vmatpush1.msra.mxu0 0.0
        %1316 = vmatprep.subr.mxu0 0.0
        %1317 = vmatpush1.msra.mxu0 0.0
        %1318 = vmatprep.subr.mxu0 0.0
        %1319 = vmatpush1.msra.mxu0 0.0
        %1320 = vmatprep.subr.mxu0 0.0
        %1321 = vmatpush1.msra.mxu0 0.0
        %1322 = vmatprep.subr.mxu0 0.0
        %1323 = vmatpush1.msra.mxu0 0.0
        %1324 = vmatprep.subr.mxu0 0.0
        %1325 = vmatpush1.msra.mxu0 0.0
        %1326 = vmatprep.subr.mxu0 0.0
        %1327 = vmatpush1.msra.mxu0 0.0
        %1328 = vmatprep.subr.mxu0 0.0
        %1329 = vmatpush1.msra.mxu0 0.0
        %1330 = vmatprep.subr.mxu0 0.0
        %1331 = vmatpush1.msra.mxu0 0.0
        %1332 = vmatprep.subr.mxu0 0.0
        %1333 = vmatpush1.msra.mxu0 %v1055
        %1334 = vmatprep.subr.mxu0 0.0
        %1335 = vmatpush2.msra.mxu0 0.0
        %1336 = vmatprep.subr.mxu0 0.0
        %1337 = vmatpush2.msra.mxu0 0.0
        %1338 = vmatprep.subr.mxu0 0.0
        %1339 = vmatpush2.msra.mxu0 0.0
        %1340 = vmatprep.subr.mxu0 0.0
        %1341 = vmatpush2.msra.mxu0 0.0
        %1342 = vmatprep.subr.mxu0 0.0
        %1343 = vmatpush2.msra.mxu0 0.0
        %1344 = vmatprep.subr.mxu0 0.0
        %1345 = vmatpush2.msra.mxu0 0.0
        %1346 = vmatprep.subr.mxu0 0.0
        %1347 = vmatpush2.msra.mxu0 0.0
        %1348 = vmatprep.subr.mxu0 0.0
        %1349 = vmatpush2.msra.mxu0 0.0
        %1350 = vmatprep.subr.mxu0 0.0
        %1351 = vmatpush2.msra.mxu0 0.0
        %1352 = vmatprep.subr.mxu0 0.0
        %1353 = vmatpush2.msra.mxu0 0.0
        %1354 = vmatprep.subr.mxu0 0.0
        %1355 = vmatpush2.msra.mxu0 0.0
        %1356 = vmatprep.subr.mxu0 0.0
        %1357 = vmatpush2.msra.mxu0 0.0
        %1358 = vmatprep.subr.mxu0 0.0
        %1359 = vmatpush2.msra.mxu0 0.0
        %1360 = vmatprep.subr.mxu0 0.0
        %1361 = vmatpush2.msra.mxu0 0.0
        %1362 = vmatprep.subr.mxu0 0.0
        %1363 = vmatpush2.msra.mxu0 0.0
        %1364 = vmatprep.subr.mxu0 0.0
        %1365 = vmatpush2.msra.mxu0 0.0
        %1366 = vmatprep.mubr.f32.mxu0 0.0
        %1367 = vmatmul.mubr.f32.gmra.mxu0 %v1300
        %v1368 = vpop.f32.mrf.mxu0
        %v1369 = vadd.f32 %v1296, %v1368
        %v1370 = vpop.f32.mrf.mxu0
        %1371 = vdwg.mxu0
        %1372 = vrot.lane.b32.xlu0 %v890, 112
        %v1373 = vpop.permute.xlu0 %1372
        %1374 = vrot.lane.b32.xlu0 %v803, 112
        %v1375 = vpop.permute.xlu0 %1374
        %v1376 = vsel %vm892, %v1373, 0
        %v1378 = vsel %vm892, %v1375, 0
        %1380 = vmatprep.subr.mxu0 0.0
        %1381 = vmatpush1.xpose.msra.mxu0 0.0
        %1382 = vmatprep.subr.mxu0 0.0
        %1383 = vmatpush1.xpose.msra.mxu0 0.0
        %1384 = vmatprep.subr.mxu0 0.0
        %1385 = vmatpush1.xpose.msra.mxu0 0.0
        %1386 = vmatprep.subr.mxu0 0.0
        %1387 = vmatpush1.xpose.msra.mxu0 0.0
        %1388 = vmatprep.subr.mxu0 0.0
        %1389 = vmatpush1.xpose.msra.mxu0 0.0
        %1390 = vmatprep.subr.mxu0 0.0
        %1391 = vmatpush1.xpose.msra.mxu0 0.0
        %1392 = vmatprep.subr.mxu0 0.0
        %1393 = vmatpush1.xpose.msra.mxu0 0.0
        %1394 = vmatprep.subr.mxu0 0.0
        %1395 = vmatpush1.xpose.msra.mxu0 0.0
        %1396 = vmatprep.subr.mxu0 0.0
        %1397 = vmatpush1.xpose.msra.mxu0 0.0
        %1398 = vmatprep.subr.mxu0 0.0
        %1399 = vmatpush1.xpose.msra.mxu0 0.0
        %1400 = vmatprep.subr.mxu0 0.0
        %1401 = vmatpush1.xpose.msra.mxu0 0.0
        %1402 = vmatprep.subr.mxu0 0.0
        %1403 = vmatpush1.xpose.msra.mxu0 0.0
        %1404 = vmatprep.subr.mxu0 0.0
        %1405 = vmatpush1.xpose.msra.mxu0 0.0
        %1406 = vmatprep.subr.mxu0 0.0
        %1407 = vmatpush1.xpose.msra.mxu0 0.0
        %1408 = vmatprep.subr.mxu0 0.0
        %1409 = vmatpush1.xpose.msra.mxu0 0.0
        %1410 = vmatprep.subr.mxu0 0.0
        %1411 = vmatpush1.xpose.msra.mxu0 %v1378
        %1412 = vmatprep.subr.mxu0 0.0
        %1413 = vmatpush2.xpose.msra.mxu0 0.0
        %1414 = vmatprep.subr.mxu0 0.0
        %1415 = vmatpush2.xpose.msra.mxu0 0.0
        %1416 = vmatprep.subr.mxu0 0.0
        %1417 = vmatpush2.xpose.msra.mxu0 0.0
        %1418 = vmatprep.subr.mxu0 0.0
        %1419 = vmatpush2.xpose.msra.mxu0 0.0
        %1420 = vmatprep.subr.mxu0 0.0
        %1421 = vmatpush2.xpose.msra.mxu0 0.0
        %1422 = vmatprep.subr.mxu0 0.0
        %1423 = vmatpush2.xpose.msra.mxu0 0.0
        %1424 = vmatprep.subr.mxu0 0.0
        %1425 = vmatpush2.xpose.msra.mxu0 0.0
        %1426 = vmatprep.subr.mxu0 0.0
        %1427 = vmatpush2.xpose.msra.mxu0 0.0
        %1428 = vmatprep.subr.mxu0 0.0
        %1429 = vmatpush2.xpose.msra.mxu0 0.0
        %1430 = vmatprep.subr.mxu0 0.0
        %1431 = vmatpush2.xpose.msra.mxu0 0.0
        %1432 = vmatprep.subr.mxu0 0.0
        %1433 = vmatpush2.xpose.msra.mxu0 0.0
        %1434 = vmatprep.subr.mxu0 0.0
        %1435 = vmatpush2.xpose.msra.mxu0 0.0
        %1436 = vmatprep.subr.mxu0 0.0
        %1437 = vmatpush2.xpose.msra.mxu0 0.0
        %1438 = vmatprep.subr.mxu0 0.0
        %1439 = vmatpush2.xpose.msra.mxu0 0.0
        %1440 = vmatprep.subr.mxu0 0.0
        %1441 = vmatpush2.xpose.msra.mxu0 0.0
        %1442 = vmatprep.subr.mxu0 0.0
        %1443 = vmatpush2.xpose.msra.mxu0 0.0
        %1444 = vmatprep.mubr.f32.mxu0 0.0
        %1445 = vmatmul.mubr.f32.gmra.mxu0 %v1376
        %v1446 = vpop.f32.mrf.mxu0
        %v1447 = vadd.f32 0.0, %v1446
        %v1448 = vpop.f32.mrf.mxu0
        %1449 = vdwg.mxu0
        %v1450 = vsel %vm891, -1e+09, %v1447
        %v1451 = vsel %vm892, %v1450, -inf
        %1452 = vmax.xlane.f32.xlu0 %v1451
        %v1453 = vpop.xlane.xlu0 %1452
        %v1454 = vsub.f32 %v1450, %v1453
        %v1455 = vmul.f32 %v1454, 1.442695
        %v1456 = vpow.pop %v1455
        %v1457 = vsel %vm892, %v1456, 0.0
        %1458 = vadd.xlane.f32.xlu0 %v1457
        %v1459 = vpop.xlane.xlu0 %1458
        %v1460 = vrcp.pop %v1459
        %v1461 = vmul.f32 %v1456, %v1460
        %v1462 = vadd.f32 %v1146, %v1461
        %1463 = vrot.lane.b32.xlu0 %v887, 112
        %v1464 = vpop.permute.xlu0 %1463
        %v1467 = vsel %vm892, %v1461, 0
        %1469 = vmatprep.subr.mxu0 0.0
        %1470 = vmatpush1.msra.mxu0 0.0
        %1471 = vmatprep.subr.mxu0 0.0
        %1472 = vmatpush1.msra.mxu0 0.0
        %1473 = vmatprep.subr.mxu0 0.0
        %1474 = vmatpush1.msra.mxu0 0.0
        %1475 = vmatprep.subr.mxu0 0.0
        %1476 = vmatpush1.msra.mxu0 0.0
        %1477 = vmatprep.subr.mxu0 0.0
        %1478 = vmatpush1.msra.mxu0 0.0
        %1479 = vmatprep.subr.mxu0 0.0
        %1480 = vmatpush1.msra.mxu0 0.0
        %1481 = vmatprep.subr.mxu0 0.0
        %1482 = vmatpush1.msra.mxu0 0.0
        %1483 = vmatprep.subr.mxu0 0.0
        %1484 = vmatpush1.msra.mxu0 0.0
        %1485 = vmatprep.subr.mxu0 0.0
        %1486 = vmatpush1.msra.mxu0 0.0
        %1487 = vmatprep.subr.mxu0 0.0
        %1488 = vmatpush1.msra.mxu0 0.0
        %1489 = vmatprep.subr.mxu0 0.0
        %1490 = vmatpush1.msra.mxu0 0.0
        %1491 = vmatprep.subr.mxu0 0.0
        %1492 = vmatpush1.msra.mxu0 0.0
        %1493 = vmatprep.subr.mxu0 0.0
        %1494 = vmatpush1.msra.mxu0 0.0
        %1495 = vmatprep.subr.mxu0 0.0
        %1496 = vmatpush1.msra.mxu0 0.0
        %1497 = vmatprep.subr.mxu0 0.0
        %1498 = vmatpush1.msra.mxu0 0.0
        %1499 = vmatprep.subr.mxu0 0.0
        %1500 = vmatpush1.msra.mxu0 %v1464
        %1501 = vmatprep.subr.mxu0 0.0
        %1502 = vmatpush2.msra.mxu0 0.0
        %1503 = vmatprep.subr.mxu0 0.0
        %1504 = vmatpush2.msra.mxu0 0.0
        %1505 = vmatprep.subr.mxu0 0.0
        %1506 = vmatpush2.msra.mxu0 0.0
        %1507 = vmatprep.subr.mxu0 0.0
        %1508 = vmatpush2.msra.mxu0 0.0
        %1509 = vmatprep.subr.mxu0 0.0
        %1510 = vmatpush2.msra.mxu0 0.0
        %1511 = vmatprep.subr.mxu0 0.0
        %1512 = vmatpush2.msra.mxu0 0.0
        %1513 = vmatprep.subr.mxu0 0.0
        %1514 = vmatpush2.msra.mxu0 0.0
        %1515 = vmatprep.subr.mxu0 0.0
        %1516 = vmatpush2.msra.mxu0 0.0
        %1517 = vmatprep.subr.mxu0 0.0
        %1518 = vmatpush2.msra.mxu0 0.0
        %1519 = vmatprep.subr.mxu0 0.0
        %1520 = vmatpush2.msra.mxu0 0.0
        %1521 = vmatprep.subr.mxu0 0.0
        %1522 = vmatpush2.msra.mxu0 0.0
        %1523 = vmatprep.subr.mxu0 0.0
        %1524 = vmatpush2.msra.mxu0 0.0
        %1525 = vmatprep.subr.mxu0 0.0
        %1526 = vmatpush2.msra.mxu0 0.0
        %1527 = vmatprep.subr.mxu0 0.0
        %1528 = vmatpush2.msra.mxu0 0.0
        %1529 = vmatprep.subr.mxu0 0.0
        %1530 = vmatpush2.msra.mxu0 0.0
        %1531 = vmatprep.subr.mxu0 0.0
        %1532 = vmatpush2.msra.mxu0 0.0
        %1533 = vmatprep.mubr.f32.mxu0 0.0
        %1534 = vmatmul.mubr.f32.gmra.mxu0 %v1467
        %v1535 = vpop.f32.mrf.mxu0
        %v1536 = vadd.f32 0.0, %v1535
        %v1537 = vpop.f32.mrf.mxu0
        %1538 = vdwg.mxu0
        %s1539 = scalar_lea.vmem [#allocation14], 16
        %v1540 = vld [vmem:[%s1539] sm:$0xff]
        %v1542 = vsel %vm892, %v1536, 0
        %1544 = vmatprep.subr.mxu0 0.0
        %1545 = vmatpush1.msra.mxu0 0.0
        %1546 = vmatprep.subr.mxu0 0.0
        %1547 = vmatpush1.msra.mxu0 0.0
        %1548 = vmatprep.subr.mxu0 0.0
        %1549 = vmatpush1.msra.mxu0 0.0
        %1550 = vmatprep.subr.mxu0 0.0
        %1551 = vmatpush1.msra.mxu0 0.0
        %1552 = vmatprep.subr.mxu0 0.0
        %1553 = vmatpush1.msra.mxu0 0.0
        %1554 = vmatprep.subr.mxu0 0.0
        %1555 = vmatpush1.msra.mxu0 0.0
        %1556 = vmatprep.subr.mxu0 0.0
        %1557 = vmatpush1.msra.mxu0 0.0
        %1558 = vmatprep.subr.mxu0 0.0
        %1559 = vmatpush1.msra.mxu0 0.0
        %1560 = vmatprep.subr.mxu0 0.0
        %1561 = vmatpush1.msra.mxu0 0.0
        %1562 = vmatprep.subr.mxu0 0.0
        %1563 = vmatpush1.msra.mxu0 0.0
        %1564 = vmatprep.subr.mxu0 0.0
        %1565 = vmatpush1.msra.mxu0 0.0
        %1566 = vmatprep.subr.mxu0 0.0
        %1567 = vmatpush1.msra.mxu0 0.0
        %1568 = vmatprep.subr.mxu0 0.0
        %1569 = vmatpush1.msra.mxu0 0.0
        %1570 = vmatprep.subr.mxu0 0.0
        %1571 = vmatpush1.msra.mxu0 0.0
        %1572 = vmatprep.subr.mxu0 0.0
        %1573 = vmatpush1.msra.mxu0 0.0
        %1574 = vmatprep.subr.mxu0 0.0
        %1575 = vmatpush1.msra.mxu0 %v1540
        %1576 = vmatprep.subr.mxu0 0.0
        %1577 = vmatpush2.msra.mxu0 0.0
        %1578 = vmatprep.subr.mxu0 0.0
        %1579 = vmatpush2.msra.mxu0 0.0
        %1580 = vmatprep.subr.mxu0 0.0
        %1581 = vmatpush2.msra.mxu0 0.0
        %1582 = vmatprep.subr.mxu0 0.0
        %1583 = vmatpush2.msra.mxu0 0.0
        %1584 = vmatprep.subr.mxu0 0.0
        %1585 = vmatpush2.msra.mxu0 0.0
        %1586 = vmatprep.subr.mxu0 0.0
        %1587 = vmatpush2.msra.mxu0 0.0
        %1588 = vmatprep.subr.mxu0 0.0
        %1589 = vmatpush2.msra.mxu0 0.0
        %1590 = vmatprep.subr.mxu0 0.0
        %1591 = vmatpush2.msra.mxu0 0.0
        %1592 = vmatprep.subr.mxu0 0.0
        %1593 = vmatpush2.msra.mxu0 0.0
        %1594 = vmatprep.subr.mxu0 0.0
        %1595 = vmatpush2.msra.mxu0 0.0
        %1596 = vmatprep.subr.mxu0 0.0
        %1597 = vmatpush2.msra.mxu0 0.0
        %1598 = vmatprep.subr.mxu0 0.0
        %1599 = vmatpush2.msra.mxu0 0.0
        %1600 = vmatprep.subr.mxu0 0.0
        %1601 = vmatpush2.msra.mxu0 0.0
        %1602 = vmatprep.subr.mxu0 0.0
        %1603 = vmatpush2.msra.mxu0 0.0
        %1604 = vmatprep.subr.mxu0 0.0
        %1605 = vmatpush2.msra.mxu0 0.0
        %1606 = vmatprep.subr.mxu0 0.0
        %1607 = vmatpush2.msra.mxu0 0.0
        %1608 = vmatprep.mubr.f32.mxu0 0.0
        %1609 = vmatmul.mubr.f32.gmra.mxu0 %v1542
        %v1610 = vpop.f32.mrf.mxu0
        %v1611 = vadd.f32 0.0, %v1610
        %v1612 = vpop.f32.mrf.mxu0
        %1613 = vdwg.mxu0
        %v1614 = vadd.f32 %v1369, %v1611
        %1615 = vrot.lane.b32.xlu0 %v890, 104
        %v1616 = vpop.permute.xlu0 %1615
        %1617 = vrot.lane.b32.xlu0 %v803, 104
        %v1618 = vpop.permute.xlu0 %1617
        %v1619 = vsel %vm892, %v1616, 0
        %v1621 = vsel %vm892, %v1618, 0
        %1623 = vmatprep.subr.mxu0 0.0
        %1624 = vmatpush1.xpose.msra.mxu0 0.0
        %1625 = vmatprep.subr.mxu0 0.0
        %1626 = vmatpush1.xpose.msra.mxu0 0.0
        %1627 = vmatprep.subr.mxu0 0.0
        %1628 = vmatpush1.xpose.msra.mxu0 0.0
        %1629 = vmatprep.subr.mxu0 0.0
        %1630 = vmatpush1.xpose.msra.mxu0 0.0
        %1631 = vmatprep.subr.mxu0 0.0
        %1632 = vmatpush1.xpose.msra.mxu0 0.0
        %1633 = vmatprep.subr.mxu0 0.0
        %1634 = vmatpush1.xpose.msra.mxu0 0.0
        %1635 = vmatprep.subr.mxu0 0.0
        %1636 = vmatpush1.xpose.msra.mxu0 0.0
        %1637 = vmatprep.subr.mxu0 0.0
        %1638 = vmatpush1.xpose.msra.mxu0 0.0
        %1639 = vmatprep.subr.mxu0 0.0
        %1640 = vmatpush1.xpose.msra.mxu0 0.0
        %1641 = vmatprep.subr.mxu0 0.0
        %1642 = vmatpush1.xpose.msra.mxu0 0.0
        %1643 = vmatprep.subr.mxu0 0.0
        %1644 = vmatpush1.xpose.msra.mxu0 0.0
        %1645 = vmatprep.subr.mxu0 0.0
        %1646 = vmatpush1.xpose.msra.mxu0 0.0
        %1647 = vmatprep.subr.mxu0 0.0
        %1648 = vmatpush1.xpose.msra.mxu0 0.0
        %1649 = vmatprep.subr.mxu0 0.0
        %1650 = vmatpush1.xpose.msra.mxu0 0.0
        %1651 = vmatprep.subr.mxu0 0.0
        %1652 = vmatpush1.xpose.msra.mxu0 0.0
        %1653 = vmatprep.subr.mxu0 0.0
        %1654 = vmatpush1.xpose.msra.mxu0 %v1621
        %1655 = vmatprep.subr.mxu0 0.0
        %1656 = vmatpush2.xpose.msra.mxu0 0.0
        %1657 = vmatprep.subr.mxu0 0.0
        %1658 = vmatpush2.xpose.msra.mxu0 0.0
        %1659 = vmatprep.subr.mxu0 0.0
        %1660 = vmatpush2.xpose.msra.mxu0 0.0
        %1661 = vmatprep.subr.mxu0 0.0
        %1662 = vmatpush2.xpose.msra.mxu0 0.0
        %1663 = vmatprep.subr.mxu0 0.0
        %1664 = vmatpush2.xpose.msra.mxu0 0.0
        %1665 = vmatprep.subr.mxu0 0.0
        %1666 = vmatpush2.xpose.msra.mxu0 0.0
        %1667 = vmatprep.subr.mxu0 0.0
        %1668 = vmatpush2.xpose.msra.mxu0 0.0
        %1669 = vmatprep.subr.mxu0 0.0
        %1670 = vmatpush2.xpose.msra.mxu0 0.0
        %1671 = vmatprep.subr.mxu0 0.0
        %1672 = vmatpush2.xpose.msra.mxu0 0.0
        %1673 = vmatprep.subr.mxu0 0.0
        %1674 = vmatpush2.xpose.msra.mxu0 0.0
        %1675 = vmatprep.subr.mxu0 0.0
        %1676 = vmatpush2.xpose.msra.mxu0 0.0
        %1677 = vmatprep.subr.mxu0 0.0
        %1678 = vmatpush2.xpose.msra.mxu0 0.0
        %1679 = vmatprep.subr.mxu0 0.0
        %1680 = vmatpush2.xpose.msra.mxu0 0.0
        %1681 = vmatprep.subr.mxu0 0.0
        %1682 = vmatpush2.xpose.msra.mxu0 0.0
        %1683 = vmatprep.subr.mxu0 0.0
        %1684 = vmatpush2.xpose.msra.mxu0 0.0
        %1685 = vmatprep.subr.mxu0 0.0
        %1686 = vmatpush2.xpose.msra.mxu0 0.0
        %1687 = vmatprep.mubr.f32.mxu0 0.0
        %1688 = vmatmul.mubr.f32.gmra.mxu0 %v1619
        %v1689 = vpop.f32.mrf.mxu0
        %v1690 = vadd.f32 0.0, %v1689
        %v1691 = vpop.f32.mrf.mxu0
        %1692 = vdwg.mxu0
        %v1693 = vsel %vm891, -1e+09, %v1690
        %v1694 = vsel %vm892, %v1693, -inf
        %1695 = vmax.xlane.f32.xlu0 %v1694
        %v1696 = vpop.xlane.xlu0 %1695
        %v1697 = vsub.f32 %v1693, %v1696
        %v1698 = vmul.f32 %v1697, 1.442695
        %v1699 = vpow.pop %v1698
        %v1700 = vsel %vm892, %v1699, 0.0
        %1701 = vadd.xlane.f32.xlu0 %v1700
        %v1702 = vpop.xlane.xlu0 %1701
        %v1703 = vrcp.pop %v1702
        %v1704 = vmul.f32 %v1699, %v1703
        %v1705 = vadd.f32 %v1462, %v1704
        %1706 = vrot.lane.b32.xlu0 %v887, 104
        %v1707 = vpop.permute.xlu0 %1706
        %v1710 = vsel %vm892, %v1704, 0
        %1712 = vmatprep.subr.mxu0 0.0
        %1713 = vmatpush1.msra.mxu0 0.0
        %1714 = vmatprep.subr.mxu0 0.0
        %1715 = vmatpush1.msra.mxu0 0.0
        %1716 = vmatprep.subr.mxu0 0.0
        %1717 = vmatpush1.msra.mxu0 0.0
        %1718 = vmatprep.subr.mxu0 0.0
        %1719 = vmatpush1.msra.mxu0 0.0
        %1720 = vmatprep.subr.mxu0 0.0
        %1721 = vmatpush1.msra.mxu0 0.0
        %1722 = vmatprep.subr.mxu0 0.0
        %1723 = vmatpush1.msra.mxu0 0.0
        %1724 = vmatprep.subr.mxu0 0.0
        %1725 = vmatpush1.msra.mxu0 0.0
        %1726 = vmatprep.subr.mxu0 0.0
        %1727 = vmatpush1.msra.mxu0 0.0
        %1728 = vmatprep.subr.mxu0 0.0
        %1729 = vmatpush1.msra.mxu0 0.0
        %1730 = vmatprep.subr.mxu0 0.0
        %1731 = vmatpush1.msra.mxu0 0.0
        %1732 = vmatprep.subr.mxu0 0.0
        %1733 = vmatpush1.msra.mxu0 0.0
        %1734 = vmatprep.subr.mxu0 0.0
        %1735 = vmatpush1.msra.mxu0 0.0
        %1736 = vmatprep.subr.mxu0 0.0
        %1737 = vmatpush1.msra.mxu0 0.0
        %1738 = vmatprep.subr.mxu0 0.0
        %1739 = vmatpush1.msra.mxu0 0.0
        %1740 = vmatprep.subr.mxu0 0.0
        %1741 = vmatpush1.msra.mxu0 0.0
        %1742 = vmatprep.subr.mxu0 0.0
        %1743 = vmatpush1.msra.mxu0 %v1707
        %1744 = vmatprep.subr.mxu0 0.0
        %1745 = vmatpush2.msra.mxu0 0.0
        %1746 = vmatprep.subr.mxu0 0.0
        %1747 = vmatpush2.msra.mxu0 0.0
        %1748 = vmatprep.subr.mxu0 0.0
        %1749 = vmatpush2.msra.mxu0 0.0
        %1750 = vmatprep.subr.mxu0 0.0
        %1751 = vmatpush2.msra.mxu0 0.0
        %1752 = vmatprep.subr.mxu0 0.0
        %1753 = vmatpush2.msra.mxu0 0.0
        %1754 = vmatprep.subr.mxu0 0.0
        %1755 = vmatpush2.msra.mxu0 0.0
        %1756 = vmatprep.subr.mxu0 0.0
        %1757 = vmatpush2.msra.mxu0 0.0
        %1758 = vmatprep.subr.mxu0 0.0
        %1759 = vmatpush2.msra.mxu0 0.0
        %1760 = vmatprep.subr.mxu0 0.0
        %1761 = vmatpush2.msra.mxu0 0.0
        %1762 = vmatprep.subr.mxu0 0.0
        %1763 = vmatpush2.msra.mxu0 0.0
        %1764 = vmatprep.subr.mxu0 0.0
        %1765 = vmatpush2.msra.mxu0 0.0
        %1766 = vmatprep.subr.mxu0 0.0
        %1767 = vmatpush2.msra.mxu0 0.0
        %1768 = vmatprep.subr.mxu0 0.0
        %1769 = vmatpush2.msra.mxu0 0.0
        %1770 = vmatprep.subr.mxu0 0.0
        %1771 = vmatpush2.msra.mxu0 0.0
        %1772 = vmatprep.subr.mxu0 0.0
        %1773 = vmatpush2.msra.mxu0 0.0
        %1774 = vmatprep.subr.mxu0 0.0
        %1775 = vmatpush2.msra.mxu0 0.0
        %1776 = vmatprep.mubr.f32.mxu0 0.0
        %1777 = vmatmul.mubr.f32.gmra.mxu0 %v1710
        %v1778 = vpop.f32.mrf.mxu0
        %v1779 = vadd.f32 0.0, %v1778
        %v1780 = vpop.f32.mrf.mxu0
        %1781 = vdwg.mxu0
        %s1782 = scalar_lea.vmem [#allocation14], 24
        %v1783 = vld [vmem:[%s1782] sm:$0xff]
        %v1785 = vsel %vm892, %v1779, 0
        %1787 = vmatprep.subr.mxu0 0.0
        %1788 = vmatpush1.msra.mxu0 0.0
        %1789 = vmatprep.subr.mxu0 0.0
        %1790 = vmatpush1.msra.mxu0 0.0
        %1791 = vmatprep.subr.mxu0 0.0
        %1792 = vmatpush1.msra.mxu0 0.0
        %1793 = vmatprep.subr.mxu0 0.0
        %1794 = vmatpush1.msra.mxu0 0.0
        %1795 = vmatprep.subr.mxu0 0.0
        %1796 = vmatpush1.msra.mxu0 0.0
        %1797 = vmatprep.subr.mxu0 0.0
        %1798 = vmatpush1.msra.mxu0 0.0
        %1799 = vmatprep.subr.mxu0 0.0
        %1800 = vmatpush1.msra.mxu0 0.0
        %1801 = vmatprep.subr.mxu0 0.0
        %1802 = vmatpush1.msra.mxu0 0.0
        %1803 = vmatprep.subr.mxu0 0.0
        %1804 = vmatpush1.msra.mxu0 0.0
        %1805 = vmatprep.subr.mxu0 0.0
        %1806 = vmatpush1.msra.mxu0 0.0
        %1807 = vmatprep.subr.mxu0 0.0
        %1808 = vmatpush1.msra.mxu0 0.0
        %1809 = vmatprep.subr.mxu0 0.0
        %1810 = vmatpush1.msra.mxu0 0.0
        %1811 = vmatprep.subr.mxu0 0.0
        %1812 = vmatpush1.msra.mxu0 0.0
        %1813 = vmatprep.subr.mxu0 0.0
        %1814 = vmatpush1.msra.mxu0 0.0
        %1815 = vmatprep.subr.mxu0 0.0
        %1816 = vmatpush1.msra.mxu0 0.0
        %1817 = vmatprep.subr.mxu0 0.0
        %1818 = vmatpush1.msra.mxu0 %v1783
        %1819 = vmatprep.subr.mxu0 0.0
        %1820 = vmatpush2.msra.mxu0 0.0
        %1821 = vmatprep.subr.mxu0 0.0
        %1822 = vmatpush2.msra.mxu0 0.0
        %1823 = vmatprep.subr.mxu0 0.0
        %1824 = vmatpush2.msra.mxu0 0.0
        %1825 = vmatprep.subr.mxu0 0.0
        %1826 = vmatpush2.msra.mxu0 0.0
        %1827 = vmatprep.subr.mxu0 0.0
        %1828 = vmatpush2.msra.mxu0 0.0
        %1829 = vmatprep.subr.mxu0 0.0
        %1830 = vmatpush2.msra.mxu0 0.0
        %1831 = vmatprep.subr.mxu0 0.0
        %1832 = vmatpush2.msra.mxu0 0.0
        %1833 = vmatprep.subr.mxu0 0.0
        %1834 = vmatpush2.msra.mxu0 0.0
        %1835 = vmatprep.subr.mxu0 0.0
        %1836 = vmatpush2.msra.mxu0 0.0
        %1837 = vmatprep.subr.mxu0 0.0
        %1838 = vmatpush2.msra.mxu0 0.0
        %1839 = vmatprep.subr.mxu0 0.0
        %1840 = vmatpush2.msra.mxu0 0.0
        %1841 = vmatprep.subr.mxu0 0.0
        %1842 = vmatpush2.msra.mxu0 0.0
        %1843 = vmatprep.subr.mxu0 0.0
        %1844 = vmatpush2.msra.mxu0 0.0
        %1845 = vmatprep.subr.mxu0 0.0
        %1846 = vmatpush2.msra.mxu0 0.0
        %1847 = vmatprep.subr.mxu0 0.0
        %1848 = vmatpush2.msra.mxu0 0.0
        %1849 = vmatprep.subr.mxu0 0.0
        %1850 = vmatpush2.msra.mxu0 0.0
        %1851 = vmatprep.mubr.f32.mxu0 0.0
        %1852 = vmatmul.mubr.f32.gmra.mxu0 %v1785
        %v1853 = vpop.f32.mrf.mxu0
        %v1854 = vadd.f32 0.0, %v1853
        %v1855 = vpop.f32.mrf.mxu0
        %1856 = vdwg.mxu0
        %v1857 = vadd.f32 %v1614, %v1854
        %v1858 = vld [vmem:[%s11] sm:$0x1]
        %v1860 = vlaneseq
        %v1861 = vshrl.u32 %v1860, 7
        %v1862 = vsub.s32 0, %v1861
        %v1863 = vrot.slane %v1858, %v1862
        %v1865 = vadd.f32 %v1857, %v1863
        %1866 = vst.msk [vmem:[%s625] sm:$0xff] %vm648, %v1865
        %v1867 = vmul.f32 %v1705, 0.25
        %1868 = vst.msk [vmem:[%s632] sm:$0xff] %vm892, %v1867
        %s1869 = sand.u32 %s322, 1
        %s1870 = scalar_lea.sflag [#allocation4], %s1869
        %s1871 = sand.u32 %s322, 1
        %s1872 = smul.addr %s1871, 8
        %s1873 = scalar_lea.vmem [#allocation16], %s1872
        %s1874 = sand.u32 %s348, 1
        %s1875 = scalar_lea.sflag [#allocation18], %s1874
        %s1876 = sand.u32 %s348, 1
        %s1877 = smul.addr %s1876, 8
        %s1878 = scalar_lea.vmem [#allocation17], %s1877
        // Predicated region
        $region101: #{tpu_custom_call.1} parent=67 // pred_check
          %p1879 = pneg %p332
        $region102: #{tpu_custom_call.1} parent=67 // pred_check_branch
          %1881 = sbr.rel (%p1879) target = $region104
        $region103: #{tpu_custom_call.1} parent=67 // pred_region
          %s1883 = ssub.s32 128, 128
          %1884 = vsyncadd %s1870, %s1883
          %s1885 = smul.addr %s42, 128
          %s1886 = scalar_lea.hbm %s12, %s1885
          %s1888 = sshll.u32 %s1873, 4
          %s1889 = int_to_ptr.vmem [resolvable:$true] %s1888
          %1891 = dma.vmem_to_hbm [thread:$0]  %s1889, 128, %s1886, %s1870
        $region104: #{tpu_custom_call.1} parent=67 // pred_fallthru
          _
        // Predicated region
        $region105: #{tpu_custom_call.1} parent=67 // pred_check
          %p1892 = pneg %p358
        $region106: #{tpu_custom_call.1} parent=67 // pred_check_branch
          %1894 = sbr.rel (%p1892) target = $region108
        $region107: #{tpu_custom_call.1} parent=67 // pred_region
          %s1896 = ssub.s32 128, 128
          %1897 = vsyncadd %s1875, %s1896
          %s1898 = smul.addr %s42, 128
          %s1899 = scalar_lea.hbm %s13, %s1898
          %s1901 = sshll.u32 %s1878, 4
          %s1902 = int_to_ptr.vmem [resolvable:$true] %s1901
          %1904 = dma.vmem_to_hbm [thread:$0]  %s1902, 128, %s1899, %s1875
        $region108: #{tpu_custom_call.1} parent=67 // pred_fallthru
          _
      $region68: #{tpu_custom_call.1} parent=5 // pred_fallthru
        _
      %p1905 = scmp.le.s32.totalorder 2, %s37
      // Predicated region
      $region109: #{tpu_custom_call.1} parent=5 // pred_check
        %p1906 = pneg %p1905
      $region110: #{tpu_custom_call.1} parent=5 // pred_check_branch
        %1908 = sbr.rel (%p1906) target = $region112
      $region111: #{tpu_custom_call.1} parent=5 // pred_region
        %s1909 = ssub.s32 %s37, 2
        // Predicated region
        $region113: #{tpu_custom_call.1} parent=111 // pred_check
          %p1910 = pneg %p338
        $region114: #{tpu_custom_call.1} parent=111 // pred_check_branch
          %1912 = sbr.rel (%p1910) target = $region116
        $region115: #{tpu_custom_call.1} parent=111 // pred_region
          %s1913 = sand.u32 %s323, 1
          %s1914 = scalar_lea.sflag [#allocation4], %s1913
          %s1915 = sand.u32 %s323, 1
          %s1916 = smul.addr %s1915, 8
          %s1917 = scalar_lea.vmem [#allocation16], %s1916
          %1918 = dma.done %s1914, 128
        $region116: #{tpu_custom_call.1} parent=111 // pred_fallthru
          _
        // Predicated region
        $region117: #{tpu_custom_call.1} parent=111 // pred_check
          %p1919 = pneg %p364
        $region118: #{tpu_custom_call.1} parent=111 // pred_check_branch
          %1921 = sbr.rel (%p1919) target = $region120
        $region119: #{tpu_custom_call.1} parent=111 // pred_region
          %s1922 = sand.u32 %s349, 1
          %s1923 = scalar_lea.sflag [#allocation18], %s1922
          %s1924 = sand.u32 %s349, 1
          %s1925 = smul.addr %s1924, 8
          %s1926 = scalar_lea.vmem [#allocation17], %s1925
          %1927 = dma.done %s1923, 128
        $region120: #{tpu_custom_call.1} parent=111 // pred_fallthru
          _
      $region112: #{tpu_custom_call.1} parent=5 // pred_fallthru
        _
    $region6: #{tpu_custom_call.1} parent=1 // loop_footer
      %s41 = sadd.s32 1, %s37
    $region7: #{tpu_custom_call.1} parent=1 // loop_footer_branch
      %36 = sbr.rel target = $region3
    $region8: #{tpu_custom_call.1} parent=1 // loop_exit
      _
    %1928 = vsyncpa [#allocation3], 1
    %s1929 = scalar_lea.sflag [#allocation3], 1
    %1930 = vsyncpa %s1929, 1
    %1931 = vsyncpa [#allocation6], 1
    %s1932 = scalar_lea.sflag [#allocation6], 1
    %1933 = vsyncpa %s1932, 1
    %1934 = vsyncpa [#allocation9], 1
    %s1935 = scalar_lea.sflag [#allocation9], 1
    %1936 = vsyncpa %s1935, 1
    %1937 = vsyncpa [#allocation12], 1
    %1938 = vsyncpa [#allocation15], 1
    %1939 = vsyncpa [#allocation4], 1
    %s1940 = scalar_lea.sflag [#allocation4], 1
    %1941 = vsyncpa %s1940, 1
    %1942 = vsyncpa [#allocation18], 1
    %s1943 = scalar_lea.sflag [#allocation18], 1
    %1944 = vsyncpa %s1943, 1

</llo_original>
